<compile_context>
chip_gen: v6e
topology: v6e:2x2x1
jax: 0.10.0
libtpu: 0.0.40
codegen_flags: <defaults>
</compile_context>

<pallas_src>
import functools

import jax
import jax.numpy as jnp
from jax.experimental import pallas as pl
from jax.experimental.pallas import tpu as pltpu

INPUT_DIM = 768
HIDDEN_DIM = 256
EMO_DIM = 6          # true emotion_detector width
EMO_HID = 32         # true emotion_fc width
EMO_PAD = 128        # lane-padded emotion widths (zero-filled)
CE_DIM = HIDDEN_DIM + EMO_PAD   # fused fc1 + emotion_detector output width (384)


def _round_up(x, m):
    return ((x + m - 1) // m) * m


def _cdiv(a, b):
    return -(-a // b)


def _memory_head_kernel(emb_ref, wce_ref, bce_ref, wef_ref, bef_ref,
                        wm_c_ref, wm_e_ref, bm_ref, out_ref, emo_ref):
    emb = emb_ref[...]                                              # [TB, 768] bf16

    # Fused: [cognitive | emo6_pad] = relu(emb @ [W1 | We_pad] + [b1 | be_pad])
    h = jnp.dot(emb, wce_ref[...],
                preferred_element_type=jnp.float32) + bce_ref[...]  # [TB, 384] f32
    h = jnp.maximum(h, 0.0)
    cog = h[:, :HIDDEN_DIM]                                         # [TB, 256] f32
    e6 = h[:, HIDDEN_DIM:]                                          # [TB, 128] f32

    # emotional = emotion_fc(emotional)  — lane-padded to 128 (cols 32.. are 0)
    e32 = jnp.dot(e6.astype(jnp.bfloat16), wef_ref[...],
                  preferred_element_type=jnp.float32) + bef_ref[...]  # [TB, 128] f32

    # output = merged_fc(cat(cognitive, emotional)) — fused split matmuls
    out = (jnp.dot(cog.astype(jnp.bfloat16), wm_c_ref[...],
                   preferred_element_type=jnp.float32)
           + jnp.dot(e32.astype(jnp.bfloat16), wm_e_ref[...],
                     preferred_element_type=jnp.float32)
           + bm_ref[...])                                           # [TB, 256] f32

    out_ref[...] = out.astype(out_ref.dtype)
    emo_ref[...] = e32[:, :EMO_HID].astype(emo_ref.dtype)           # [TB, 32]


def _choose_tiles(B, tile_b):
    if tile_b % 16 != 0:
        raise ValueError(f"tile_b must be a multiple of 16 (got {tile_b})")
    # v7x: force >= 2 tiles when B >= 32 so the 'parallel' batch axis shards
    # across both TensorCores; harmless single-TC (v5e/v6e).
    min_tiles = 2 if B >= 32 else 1
    n_tiles = max(_cdiv(B, tile_b), min_tiles)
    tb = _round_up(_cdiv(B, n_tiles), 16)          # padding bounded by 15 rows/tile
    b_pad = n_tiles * tb
    return tb, b_pad, n_tiles


@functools.partial(jax.jit, static_argnames=("tile_b",))
def enhanced_memory_layer(emb, kparams, *, tile_b=512):
    """emb: [B, INPUT_DIM] CLS embeddings. Returns (output [B,256], emotional [B,32])."""
    B = emb.shape[0]
    TB, B_pad, n_tiles = _choose_tiles(B, tile_b)

    emb_p = emb.astype(jnp.bfloat16)
    if B_pad != B:
        emb_p = jnp.pad(emb_p, ((0, B_pad - B), (0, 0)))

    # Weights stay VMEM-resident: their index_map always returns block (0, 0).
    def resident(shape):
        return pl.BlockSpec(shape, lambda i: (0, 0))

    in_specs = [
        pl.BlockSpec((TB, INPUT_DIM), lambda i: (i, 0)),      # emb tile (pipelined)
        resident((INPUT_DIM, CE_DIM)),                        # [W1 | We_pad]
        resident((1, CE_DIM)),                                # [b1 | be_pad]
        resident((EMO_PAD, EMO_PAD)),                         # wef (padded)
        resident((1, EMO_PAD)),                               # bef (padded)
        resident((HIDDEN_DIM, HIDDEN_DIM)),                   # wm_c
        resident((EMO_PAD, HIDDEN_DIM)),                      # wm_e (padded)
        resident((1, HIDDEN_DIM)),                            # bm
    ]
    out_specs = (
        pl.BlockSpec((TB, HIDDEN_DIM), lambda i: (i, 0)),     # output
        pl.BlockSpec((TB, EMO_HID), lambda i: (i, 0)),        # emotional (narrow, full-dim)
    )
    out_shape = (
        jax.ShapeDtypeStruct((B_pad, HIDDEN_DIM), jnp.bfloat16),
        jax.ShapeDtypeStruct((B_pad, EMO_HID), jnp.bfloat16),
    )

    flops = 2 * B_pad * (INPUT_DIM * CE_DIM                  # fused fc1 + emotion_detector
                         + EMO_PAD * EMO_PAD                 # emotion_fc (padded)
                         + HIDDEN_DIM * HIDDEN_DIM           # merged_fc (cog half)
                         + EMO_PAD * HIDDEN_DIM)             # merged_fc (emo half)
    weight_bytes = 2 * (INPUT_DIM * CE_DIM + EMO_PAD * EMO_PAD
                        + HIDDEN_DIM * HIDDEN_DIM + EMO_PAD * HIDDEN_DIM)
    bytes_accessed = (B_pad * INPUT_DIM * 2                  # emb (bf16)
                      + weight_bytes
                      + 4 * (CE_DIM + EMO_PAD + HIDDEN_DIM)  # biases (f32)
                      + B_pad * (HIDDEN_DIM + EMO_HID) * 2)  # outputs (bf16)

    fn = pl.pallas_call(
        _memory_head_kernel,
        out_shape=out_shape,
        grid_spec=pltpu.PrefetchScalarGridSpec(
            num_scalar_prefetch=0,
            grid=(n_tiles,),
            in_specs=in_specs,
            out_specs=out_specs,
        ),
        compiler_params=pltpu.CompilerParams(
            dimension_semantics=("parallel",),
            vmem_limit_bytes=32 * 1024 * 1024,
        ),
        cost_estimate=pl.CostEstimate(
            flops=flops, transcendentals=0, bytes_accessed=bytes_accessed),
    )

    out, emo = fn(emb_p,
                  kparams["w_ce"], kparams["b_ce"],
                  kparams["wef"], kparams["bef"],
                  kparams["wm_c"], kparams["wm_e"], kparams["bm"])
    if B_pad != B:
        out = out[:B]
        emo = emo[:B]
    return out, emo


def init_params(key):
    """Deterministic synthetic f32 parameters with torch Linear semantics
    (weights pre-transposed to [in_features, out_features])."""
    ks = jax.random.split(key, 8)

    def lin(kw, fan_in, fan_out):
        bound = 1.0 / jnp.sqrt(fan_in)
        return jax.random.uniform(kw, (fan_in, fan_out), jnp.float32, -bound, bound)

    return {
        "w1": lin(ks[0], INPUT_DIM, HIDDEN_DIM),
        "b1": jax.random.uniform(ks[1], (1, HIDDEN_DIM), jnp.float32, -0.05, 0.05),
        "we": lin(ks[2], INPUT_DIM, EMO_DIM),
        "be": jax.random.uniform(ks[3], (1, EMO_DIM), jnp.float32, -0.05, 0.05),
        "wef": lin(ks[4], EMO_DIM, EMO_HID),
        "bef": jax.random.uniform(ks[5], (1, EMO_HID), jnp.float32, -0.05, 0.05),
        "wm": lin(ks[6], HIDDEN_DIM + EMO_HID, HIDDEN_DIM),
        "bm": jax.random.uniform(ks[7], (1, HIDDEN_DIM), jnp.float32, -0.05, 0.05),
    }


def pack_params(p):
    """Cast weights to bf16, zero-pad the emotion path to 128 lanes, and fuse
    the two emb-LHS weights into one [768, 384] matrix.

    Zero padding is exact: relu(0 + 0) = 0, and zero rows of the padded
    weights contribute nothing to downstream matmuls.
    """
    we_p = jnp.zeros((INPUT_DIM, EMO_PAD), jnp.float32).at[:, :EMO_DIM].set(p["we"])
    be_p = jnp.zeros((1, EMO_PAD), jnp.float32).at[:, :EMO_DIM].set(p["be"])
    wef_p = (jnp.zeros((EMO_PAD, EMO_PAD), jnp.float32)
             .at[:EMO_DIM, :EMO_HID].set(p["wef"]))
    bef_p = jnp.zeros((1, EMO_PAD), jnp.float32).at[:, :EMO_HID].set(p["bef"])
    wm_e_p = (jnp.zeros((EMO_PAD, HIDDEN_DIM), jnp.float32)
              .at[:EMO_HID, :].set(p["wm"][HIDDEN_DIM:, :]))

    w_ce = jnp.concatenate([p["w1"], we_p], axis=1)   # [768, 384]
    b_ce = jnp.concatenate([p["b1"], be_p], axis=1)   # [1, 384]

    bf = jnp.bfloat16
    return {
        "w_ce": w_ce.astype(bf), "b_ce": b_ce,
        "wef": wef_p.astype(bf), "bef": bef_p,
        "wm_c": p["wm"][:HIDDEN_DIM, :].astype(bf),
        "wm_e": wm_e_p.astype(bf),
        "bm": p["bm"],
    }


def reference(emb, p):
    """Pure-JAX f32 reference with the original module's semantics."""
    cog = jnp.maximum(emb @ p["w1"] + p["b1"], 0.0)
    e6 = jnp.maximum(emb @ p["we"] + p["be"], 0.0)
    e32 = e6 @ p["wef"] + p["bef"]
    merged = jnp.concatenate([cog, e32], axis=1)
    out = merged @ p["wm"] + p["bm"]
    return out, e32


if __name__ == "__main__":
    key = jax.random.PRNGKey(0)
    k_emb, k_par = jax.random.split(key)

    B = 2  # small batch of "sentences"; embeddings stand in for BERT CLS output
    emb = jax.random.normal(k_emb, (B, INPUT_DIM), jnp.float32)
    params = init_params(k_par)
    kparams = pack_params(params)

    out, emotional = enhanced_memory_layer(emb, kparams)
    out = jax.block_until_ready(out)
    emotional = jax.block_until_ready(emotional)

    ref_out, ref_emo = reference(emb, params)
    assert out.shape == (B, HIDDEN_DIM) and emotional.shape == (B, EMO_HID)
    # bf16 weights/activations/outputs with f32 accumulation -> loosened tolerance.
    assert jnp.allclose(out.astype(jnp.float32), ref_out, atol=3e-2, rtol=3e-2)
    assert jnp.allclose(emotional.astype(jnp.float32), ref_emo, atol=3e-2, rtol=3e-2)

    print("KERNEL_OK")
</pallas_src>

<mosaic_0001>
module attributes {stable_mosaic.version = 11 : i64} {
  func.func @_memory_head_kernel(%arg0: i32, %arg1: memref<16x768xbf16, #tpu.memory_space<vmem>>, %arg2: memref<768x384xbf16, #tpu.memory_space<vmem>>, %arg3: memref<1x384xf32, #tpu.memory_space<vmem>>, %arg4: memref<128x128xbf16, #tpu.memory_space<vmem>>, %arg5: memref<1x128xf32, #tpu.memory_space<vmem>>, %arg6: memref<256x256xbf16, #tpu.memory_space<vmem>>, %arg7: memref<128x256xbf16, #tpu.memory_space<vmem>>, %arg8: memref<1x256xf32, #tpu.memory_space<vmem>>, %arg9: memref<16x256xbf16, #tpu.memory_space<vmem>>, %arg10: memref<16x32xbf16, #tpu.memory_space<vmem>>) attributes {dimension_semantics = [#tpu.dimension_semantics<parallel>], iteration_bounds = array<i64: 1>, scalar_prefetch = 0 : i64, scratch_operands = 0 : i64, tpu.core_type = #tpu.core_type<tc>, window_params = [{transform_indices = @transform_0, window_bounds = array<i64: 16, 768>}, {pipeline_mode = #tpu.pipeline_mode<synchronous>, transform_indices = @transform_1, window_bounds = array<i64: 768, 384>}, {pipeline_mode = #tpu.pipeline_mode<synchronous>, transform_indices = @transform_2, window_bounds = array<i64: 1, 384>}, {pipeline_mode = #tpu.pipeline_mode<synchronous>, transform_indices = @transform_3, window_bounds = array<i64: 128, 128>}, {pipeline_mode = #tpu.pipeline_mode<synchronous>, transform_indices = @transform_4, window_bounds = array<i64: 1, 128>}, {pipeline_mode = #tpu.pipeline_mode<synchronous>, transform_indices = @transform_5, window_bounds = array<i64: 256, 256>}, {pipeline_mode = #tpu.pipeline_mode<synchronous>, transform_indices = @transform_6, window_bounds = array<i64: 128, 256>}, {pipeline_mode = #tpu.pipeline_mode<synchronous>, transform_indices = @transform_7, window_bounds = array<i64: 1, 256>}, {transform_indices = @transform_8, window_bounds = array<i64: 16, 256>}, {transform_indices = @transform_9, window_bounds = array<i64: 16, 32>}]} {
    %c0 = arith.constant 0 : index
    %c0_0 = arith.constant 0 : index
    %0 = vector.load %arg1[%c0, %c0_0] : memref<16x768xbf16, #tpu.memory_space<vmem>>, vector<16x768xbf16>
    %c0_1 = arith.constant 0 : index
    %c0_2 = arith.constant 0 : index
    %1 = vector.load %arg2[%c0_1, %c0_2] : memref<768x384xbf16, #tpu.memory_space<vmem>>, vector<768x384xbf16>
    %cst = arith.constant dense<0.000000e+00> : vector<16x384xf32>
    %2 = tpu.matmul %0, %1, %cst {dimension_numbers = #tpu.dot_dimension_numbers<[1], [0], [0], [1], [0, 0, 1, 1], [], []>} : vector<16x768xbf16>, vector<768x384xbf16>, vector<16x384xf32> -> vector<16x384xf32>
    %c0_3 = arith.constant 0 : index
    %c0_4 = arith.constant 0 : index
    %3 = vector.load %arg3[%c0_3, %c0_4] : memref<1x384xf32, #tpu.memory_space<vmem>>, vector<1x384xf32>
    %4 = vector.broadcast %3 : vector<1x384xf32> to vector<16x384xf32>
    %5 = arith.addf %2, %4 : vector<16x384xf32>
    %cst_5 = arith.constant 0.000000e+00 : f32
    %6 = vector.broadcast %cst_5 : f32 to vector<16x384xf32>
    %7 = arith.maximumf %5, %6 : vector<16x384xf32>
    %8 = vector.extract_strided_slice %7 {offsets = [0, 0], sizes = [16, 256], strides = [1, 1]} : vector<16x384xf32> to vector<16x256xf32>
    %9 = vector.extract_strided_slice %7 {offsets = [0, 256], sizes = [16, 128], strides = [1, 1]} : vector<16x384xf32> to vector<16x128xf32>
    %10 = arith.truncf %9 : vector<16x128xf32> to vector<16x128xbf16>
    %c0_6 = arith.constant 0 : index
    %c0_7 = arith.constant 0 : index
    %11 = vector.load %arg4[%c0_6, %c0_7] : memref<128x128xbf16, #tpu.memory_space<vmem>>, vector<128x128xbf16>
    %cst_8 = arith.constant dense<0.000000e+00> : vector<16x128xf32>
    %12 = tpu.matmul %10, %11, %cst_8 {dimension_numbers = #tpu.dot_dimension_numbers<[1], [0], [0], [1], [0, 0, 1, 1], [], []>} : vector<16x128xbf16>, vector<128x128xbf16>, vector<16x128xf32> -> vector<16x128xf32>
    %c0_9 = arith.constant 0 : index
    %c0_10 = arith.constant 0 : index
    %13 = vector.load %arg5[%c0_9, %c0_10] : memref<1x128xf32, #tpu.memory_space<vmem>>, vector<1x128xf32>
    %14 = vector.broadcast %13 : vector<1x128xf32> to vector<16x128xf32>
    %15 = arith.addf %12, %14 : vector<16x128xf32>
    %16 = arith.truncf %8 : vector<16x256xf32> to vector<16x256xbf16>
    %c0_11 = arith.constant 0 : index
    %c0_12 = arith.constant 0 : index
    %17 = vector.load %arg6[%c0_11, %c0_12] : memref<256x256xbf16, #tpu.memory_space<vmem>>, vector<256x256xbf16>
    %cst_13 = arith.constant dense<0.000000e+00> : vector<16x256xf32>
    %18 = tpu.matmul %16, %17, %cst_13 {dimension_numbers = #tpu.dot_dimension_numbers<[1], [0], [0], [1], [0, 0, 1, 1], [], []>} : vector<16x256xbf16>, vector<256x256xbf16>, vector<16x256xf32> -> vector<16x256xf32>
    %19 = arith.truncf %15 : vector<16x128xf32> to vector<16x128xbf16>
    %c0_14 = arith.constant 0 : index
    %c0_15 = arith.constant 0 : index
    %20 = vector.load %arg7[%c0_14, %c0_15] : memref<128x256xbf16, #tpu.memory_space<vmem>>, vector<128x256xbf16>
    %cst_16 = arith.constant dense<0.000000e+00> : vector<16x256xf32>
    %21 = tpu.matmul %19, %20, %cst_16 {dimension_numbers = #tpu.dot_dimension_numbers<[1], [0], [0], [1], [0, 0, 1, 1], [], []>} : vector<16x128xbf16>, vector<128x256xbf16>, vector<16x256xf32> -> vector<16x256xf32>
    %22 = arith.addf %18, %21 : vector<16x256xf32>
    %c0_17 = arith.constant 0 : index
    %c0_18 = arith.constant 0 : index
    %23 = vector.load %arg8[%c0_17, %c0_18] : memref<1x256xf32, #tpu.memory_space<vmem>>, vector<1x256xf32>
    %24 = vector.broadcast %23 : vector<1x256xf32> to vector<16x256xf32>
    %25 = arith.addf %22, %24 : vector<16x256xf32>
    %26 = arith.truncf %25 : vector<16x256xf32> to vector<16x256xbf16>
    %c0_19 = arith.constant 0 : index
    %c0_20 = arith.constant 0 : index
    %27 = vector.load %arg9[%c0_19, %c0_20] : memref<16x256xbf16, #tpu.memory_space<vmem>>, vector<16x256xbf16>
    tpu.vector_store %arg9[%c0_19, %c0_20], %26 {strides = array<i32>} : memref<16x256xbf16, #tpu.memory_space<vmem>>, vector<16x256xbf16>,
    %28 = vector.extract_strided_slice %15 {offsets = [0, 0], sizes = [16, 32], strides = [1, 1]} : vector<16x128xf32> to vector<16x32xf32>
    %29 = arith.truncf %28 : vector<16x32xf32> to vector<16x32xbf16>
    %c0_21 = arith.constant 0 : index
    %c0_22 = arith.constant 0 : index
    %30 = vector.load %arg10[%c0_21, %c0_22] : memref<16x32xbf16, #tpu.memory_space<vmem>>, vector<16x32xbf16>
    tpu.vector_store %arg10[%c0_21, %c0_22], %29 {strides = array<i32>} : memref<16x32xbf16, #tpu.memory_space<vmem>>, vector<16x32xbf16>,
    return
  }
  func.func @transform_0(%arg0: i32) -> (i32, i32) {
    %c0_i32 = arith.constant 0 : i32
    %c0_i32_0 = arith.constant 0 : i32
    return %arg0, %c0_i32 : i32, i32
  }
  func.func @transform_1(%arg0: i32) -> (i32, i32) {
    %c0_i32 = arith.constant 0 : i32
    %c0_i32_0 = arith.constant 0 : i32
    %c0_i32_1 = arith.constant 0 : i32
    return %c0_i32, %c0_i32_0 : i32, i32
  }
  func.func @transform_2(%arg0: i32) -> (i32, i32) {
    %c0_i32 = arith.constant 0 : i32
    %c0_i32_0 = arith.constant 0 : i32
    %c0_i32_1 = arith.constant 0 : i32
    return %c0_i32, %c0_i32_0 : i32, i32
  }
  func.func @transform_3(%arg0: i32) -> (i32, i32) {
    %c0_i32 = arith.constant 0 : i32
    %c0_i32_0 = arith.constant 0 : i32
    %c0_i32_1 = arith.constant 0 : i32
    return %c0_i32, %c0_i32_0 : i32, i32
  }
  func.func @transform_4(%arg0: i32) -> (i32, i32) {
    %c0_i32 = arith.constant 0 : i32
    %c0_i32_0 = arith.constant 0 : i32
    %c0_i32_1 = arith.constant 0 : i32
    return %c0_i32, %c0_i32_0 : i32, i32
  }
  func.func @transform_5(%arg0: i32) -> (i32, i32) {
    %c0_i32 = arith.constant 0 : i32
    %c0_i32_0 = arith.constant 0 : i32
    %c0_i32_1 = arith.constant 0 : i32
    return %c0_i32, %c0_i32_0 : i32, i32
  }
  func.func @transform_6(%arg0: i32) -> (i32, i32) {
    %c0_i32 = arith.constant 0 : i32
    %c0_i32_0 = arith.constant 0 : i32
    %c0_i32_1 = arith.constant 0 : i32
    return %c0_i32, %c0_i32_0 : i32, i32
  }
  func.func @transform_7(%arg0: i32) -> (i32, i32) {
    %c0_i32 = arith.constant 0 : i32
    %c0_i32_0 = arith.constant 0 : i32
    %c0_i32_1 = arith.constant 0 : i32
    return %c0_i32, %c0_i32_0 : i32, i32
  }
  func.func @transform_8(%arg0: i32) -> (i32, i32) {
    %c0_i32 = arith.constant 0 : i32
    %c0_i32_0 = arith.constant 0 : i32
    return %arg0, %c0_i32 : i32, i32
  }
  func.func @transform_9(%arg0: i32) -> (i32, i32) {
    %c0_i32 = arith.constant 0 : i32
    %c0_i32_0 = arith.constant 0 : i32
    return %arg0, %c0_i32 : i32, i32
  }
}

</mosaic_0001>

<llo_original>
// kernel: enhanced_memory_layer.1
$region0: #{enhanced_memory_layer.1}
  #allocation0 [shape = 'u32[]', space=smem, size = 0x4, offset = 0x4, fixed_abs, tag = 'smem constant byte address 0x4 - core index']
  #allocation1 [shape = 'u32[144,128]{1,0:T(1,128)}', space=vmem, size = 0x12000, scoped, tag = 'internal scratch']
  %s0 = inlined_call_operand.vmem [shape: bf16[16,768], index: 0, kind: input, shape index: {}]
  %s1 = inlined_call_operand.hbm [shape: bf16[768,384], index: 1, kind: input, shape index: {}]
  %s2 = inlined_call_operand.vmem [shape: f32[1,384], index: 2, kind: input, shape index: {}]
  %s3 = inlined_call_operand.vmem [shape: bf16[128,128], index: 3, kind: input, shape index: {}]
  %s4 = inlined_call_operand.vmem [shape: f32[1,128], index: 4, kind: input, shape index: {}]
  %s5 = inlined_call_operand.hbm [shape: bf16[256,256], index: 5, kind: input, shape index: {}]
  %s6 = inlined_call_operand.hbm [shape: bf16[128,256], index: 6, kind: input, shape index: {}]
  %s7 = inlined_call_operand.vmem [shape: f32[1,256], index: 7, kind: input, shape index: {}]
  %s8 = inlined_call_operand.vmem [shape: bf16[16,256], index: 8, kind: output, shape index: {0}]
  %s9 = inlined_call_operand.vmem [shape: bf16[16,32], index: 9, kind: output, shape index: {1}]
  %10 = xla_tuple %s8, %s9
  %s11 = sld [smem:[#allocation0]]
  $region62: #{enhanced_memory_layer.1} parent=0
    _
  %s13 = ssub.s32 1, %s11
  %s14 = scalar_select 0, %s13, %s11
  $region1: #{enhanced_memory_layer.1} parent=0
    #allocation2 [shape = 'u8[589824]{0}', space=vmem, size = 0x90000, scoped, tag = 'input window, operand 1, single buffered']
    #allocation3 [shape = 's32[1]{0}', space=sflag, size = 0x4, scoped, tag = 'scoped memory for enhanced_memory_layer.1']
    #allocation4 [shape = 'u8[131072]{0}', space=vmem, size = 0x20000, scoped, tag = 'input window, operand 5, single buffered']
    #allocation5 [shape = 's32[1]{0}', space=sflag, size = 0x4, scoped, tag = 'scoped memory for enhanced_memory_layer.1']
    #allocation6 [shape = 'u8[65536]{0}', space=vmem, size = 0x10000, scoped, tag = 'input window, operand 6, single buffered']
    %15 = vsyncpa [#allocation3], 0
    %16 = vsyncpa [#allocation5], 0
    // Predicated region
    $region2: #{enhanced_memory_layer.1} parent=1 // pred_check
      _
    $region3: #{enhanced_memory_layer.1} parent=1 // pred_check_branch
      %18 = sbr.rel (0) target = $region5
    $region4: #{enhanced_memory_layer.1} parent=1 // pred_region
      _
    $region5: #{enhanced_memory_layer.1} parent=1 // pred_fallthru
      _
    // Predicated region
    $region6: #{enhanced_memory_layer.1} parent=1 // pred_check
      _
    $region7: #{enhanced_memory_layer.1} parent=1 // pred_check_branch
      %20 = sbr.rel (0) target = $region9
    $region8: #{enhanced_memory_layer.1} parent=1 // pred_region
      %s22 = ssub.s32 18432, 18432
      %23 = vsyncadd [#allocation3], %s22
      %s24 = sshll.u32 [#allocation2], 4
      %s25 = int_to_ptr.vmem [resolvable:$true] %s24
      %30 = dma.hbm_to_vmem [thread:$0]  %s1, 18432, %s25, [#allocation3], 192, 192, 12
    $region9: #{enhanced_memory_layer.1} parent=1 // pred_fallthru
      _
    // Predicated region
    $region10: #{enhanced_memory_layer.1} parent=1 // pred_check
      _
    $region11: #{enhanced_memory_layer.1} parent=1 // pred_check_branch
      %32 = sbr.rel (0) target = $region13
    $region12: #{enhanced_memory_layer.1} parent=1 // pred_region
      _
    $region13: #{enhanced_memory_layer.1} parent=1 // pred_fallthru
      _
    // Predicated region
    $region14: #{enhanced_memory_layer.1} parent=1 // pred_check
      _
    $region15: #{enhanced_memory_layer.1} parent=1 // pred_check_branch
      %34 = sbr.rel (0) target = $region17
    $region16: #{enhanced_memory_layer.1} parent=1 // pred_region
      _
    $region17: #{enhanced_memory_layer.1} parent=1 // pred_fallthru
      _
    // Predicated region
    $region18: #{enhanced_memory_layer.1} parent=1 // pred_check
      _
    $region19: #{enhanced_memory_layer.1} parent=1 // pred_check_branch
      %36 = sbr.rel (0) target = $region21
    $region20: #{enhanced_memory_layer.1} parent=1 // pred_region
      _
    $region21: #{enhanced_memory_layer.1} parent=1 // pred_fallthru
      _
    // Predicated region
    $region22: #{enhanced_memory_layer.1} parent=1 // pred_check
      _
    $region23: #{enhanced_memory_layer.1} parent=1 // pred_check_branch
      %38 = sbr.rel (0) target = $region25
    $region24: #{enhanced_memory_layer.1} parent=1 // pred_region
      %s40 = ssub.s32 4096, 4096
      %41 = vsyncadd [#allocation5], %s40
      %s42 = sshll.u32 [#allocation4], 4
      %s43 = int_to_ptr.vmem [resolvable:$true] %s42
      %48 = dma.hbm_to_vmem [thread:$0]  %s5, 4096, %s43, [#allocation5], 128, 128, 8
    $region25: #{enhanced_memory_layer.1} parent=1 // pred_fallthru
      _
    // Predicated region
    $region26: #{enhanced_memory_layer.1} parent=1 // pred_check
      _
    $region27: #{enhanced_memory_layer.1} parent=1 // pred_check_branch
      %50 = sbr.rel (0) target = $region29
    $region28: #{enhanced_memory_layer.1} parent=1 // pred_region
      %s52 = ssub.s32 2048, 2048
      %53 = vsyncadd [#allocation5], %s52
      %s54 = sshll.u32 [#allocation6], 4
      %s55 = int_to_ptr.vmem [resolvable:$true] %s54
      %60 = dma.hbm_to_vmem [thread:$0]  %s6, 2048, %s55, [#allocation5], 128, 128, 8
    $region29: #{enhanced_memory_layer.1} parent=1 // pred_fallthru
      _
    // Predicated region
    $region30: #{enhanced_memory_layer.1} parent=1 // pred_check
      _
    $region31: #{enhanced_memory_layer.1} parent=1 // pred_check_branch
      %62 = sbr.rel (0) target = $region33
    $region32: #{enhanced_memory_layer.1} parent=1 // pred_region
      _
    $region33: #{enhanced_memory_layer.1} parent=1 // pred_fallthru
      _
    // Predicated region
    $region34: #{enhanced_memory_layer.1} parent=1 // pred_check
      _
    $region35: #{enhanced_memory_layer.1} parent=1 // pred_check_branch
      %64 = sbr.rel (0) target = $region37
    $region36: #{enhanced_memory_layer.1} parent=1 // pred_region
      %65 = dma.done [#allocation3], 18432
    $region37: #{enhanced_memory_layer.1} parent=1 // pred_fallthru
      _
    // Predicated region
    $region38: #{enhanced_memory_layer.1} parent=1 // pred_check
      _
    $region39: #{enhanced_memory_layer.1} parent=1 // pred_check_branch
      %67 = sbr.rel (0) target = $region41
    $region40: #{enhanced_memory_layer.1} parent=1 // pred_region
      %68 = dma.done [#allocation5], 4096
    $region41: #{enhanced_memory_layer.1} parent=1 // pred_fallthru
      _
    // Predicated region
    $region42: #{enhanced_memory_layer.1} parent=1 // pred_check
      _
    $region43: #{enhanced_memory_layer.1} parent=1 // pred_check_branch
      %70 = sbr.rel (0) target = $region45
    $region44: #{enhanced_memory_layer.1} parent=1 // pred_region
      %71 = dma.done [#allocation5], 2048
    $region45: #{enhanced_memory_layer.1} parent=1 // pred_fallthru
      _
    %v73 = vld [vmem:[%s0] sm:$0xff]
    %v74 = vld [vmem:[%s0 + $0x8] sm:$0xff]
    %v75 = vld [vmem:[%s0 + $0x10] sm:$0xff]
    %v76 = vld [vmem:[%s0 + $0x18] sm:$0xff]
    %v77 = vld [vmem:[%s0 + $0x20] sm:$0xff]
    %v78 = vld [vmem:[%s0 + $0x28] sm:$0xff]
    %v79 = vld [vmem:[#allocation2] sm:$0xff]
    %v80 = vld [vmem:[#allocation2 + $0x8] sm:$0xf]
    %v81 = vld [vmem:[#allocation2 + $0xc] sm:$0xff]
    %v82 = vld [vmem:[#allocation2 + $0x14] sm:$0xf]
    %v83 = vld [vmem:[#allocation2 + $0x18] sm:$0xff]
    %v84 = vld [vmem:[#allocation2 + $0x20] sm:$0xf]
    %v85 = vld [vmem:[#allocation2 + $0x24] sm:$0xff]
    %v86 = vld [vmem:[#allocation2 + $0x2c] sm:$0xf]
    %v87 = vld [vmem:[#allocation2 + $0x30] sm:$0xff]
    %v88 = vld [vmem:[#allocation2 + $0x38] sm:$0xf]
    %v89 = vld [vmem:[#allocation2 + $0x3c] sm:$0xff]
    %v90 = vld [vmem:[#allocation2 + $0x44] sm:$0xf]
    %v91 = vld [vmem:[#allocation2 + $0x48] sm:$0xff]
    %v92 = vld [vmem:[#allocation2 + $0x50] sm:$0xf]
    %v93 = vld [vmem:[#allocation2 + $0x54] sm:$0xff]
    %v94 = vld [vmem:[#allocation2 + $0x5c] sm:$0xf]
    %v95 = vld [vmem:[#allocation2 + $0x60] sm:$0xff]
    %v96 = vld [vmem:[#allocation2 + $0x68] sm:$0xf]
    %v97 = vld [vmem:[#allocation2 + $0x6c] sm:$0xff]
    %v98 = vld [vmem:[#allocation2 + $0x74] sm:$0xf]
    %v99 = vld [vmem:[#allocation2 + $0x78] sm:$0xff]
    %v100 = vld [vmem:[#allocation2 + $0x80] sm:$0xf]
    %v101 = vld [vmem:[#allocation2 + $0x84] sm:$0xff]
    %v102 = vld [vmem:[#allocation2 + $0x8c] sm:$0xf]
    %v103 = vld [vmem:[#allocation2 + $0x90] sm:$0xff]
    %v104 = vld [vmem:[#allocation2 + $0x98] sm:$0xf]
    %v105 = vld [vmem:[#allocation2 + $0x9c] sm:$0xff]
    %v106 = vld [vmem:[#allocation2 + $0xa4] sm:$0xf]
    %v107 = vld [vmem:[#allocation2 + $0xa8] sm:$0xff]
    %v108 = vld [vmem:[#allocation2 + $0xb0] sm:$0xf]
    %v109 = vld [vmem:[#allocation2 + $0xb4] sm:$0xff]
    %v110 = vld [vmem:[#allocation2 + $0xbc] sm:$0xf]
    %v111 = vld [vmem:[#allocation2 + $0xc0] sm:$0xff]
    %v112 = vld [vmem:[#allocation2 + $0xc8] sm:$0xf]
    %v113 = vld [vmem:[#allocation2 + $0xcc] sm:$0xff]
    %v114 = vld [vmem:[#allocation2 + $0xd4] sm:$0xf]
    %v115 = vld [vmem:[#allocation2 + $0xd8] sm:$0xff]
    %v116 = vld [vmem:[#allocation2 + $0xe0] sm:$0xf]
    %v117 = vld [vmem:[#allocation2 + $0xe4] sm:$0xff]
    %v118 = vld [vmem:[#allocation2 + $0xec] sm:$0xf]
    %v119 = vld [vmem:[#allocation2 + $0xf0] sm:$0xff]
    %v120 = vld [vmem:[#allocation2 + $0xf8] sm:$0xf]
    %v121 = vld [vmem:[#allocation2 + $0xfc] sm:$0xff]
    %v122 = vld [vmem:[#allocation2 + $0x104] sm:$0xf]
    %v123 = vld [vmem:[#allocation2 + $0x108] sm:$0xff]
    %v124 = vld [vmem:[#allocation2 + $0x110] sm:$0xf]
    %v125 = vld [vmem:[#allocation2 + $0x114] sm:$0xff]
    %v126 = vld [vmem:[#allocation2 + $0x11c] sm:$0xf]
    %v127 = vld [vmem:[#allocation2 + $0x120] sm:$0xff]
    %v128 = vld [vmem:[#allocation2 + $0x128] sm:$0xf]
    %v129 = vld [vmem:[#allocation2 + $0x12c] sm:$0xff]
    %v130 = vld [vmem:[#allocation2 + $0x134] sm:$0xf]
    %v131 = vld [vmem:[#allocation2 + $0x138] sm:$0xff]
    %v132 = vld [vmem:[#allocation2 + $0x140] sm:$0xf]
    %v133 = vld [vmem:[#allocation2 + $0x144] sm:$0xff]
    %v134 = vld [vmem:[#allocation2 + $0x14c] sm:$0xf]
    %v135 = vld [vmem:[#allocation2 + $0x150] sm:$0xff]
    %v136 = vld [vmem:[#allocation2 + $0x158] sm:$0xf]
    %v137 = vld [vmem:[#allocation2 + $0x15c] sm:$0xff]
    %v138 = vld [vmem:[#allocation2 + $0x164] sm:$0xf]
    %v139 = vld [vmem:[#allocation2 + $0x168] sm:$0xff]
    %v140 = vld [vmem:[#allocation2 + $0x170] sm:$0xf]
    %v141 = vld [vmem:[#allocation2 + $0x174] sm:$0xff]
    %v142 = vld [vmem:[#allocation2 + $0x17c] sm:$0xf]
    %v143 = vld [vmem:[#allocation2 + $0x180] sm:$0xff]
    %v144 = vld [vmem:[#allocation2 + $0x188] sm:$0xf]
    %v145 = vld [vmem:[#allocation2 + $0x18c] sm:$0xff]
    %v146 = vld [vmem:[#allocation2 + $0x194] sm:$0xf]
    %v147 = vld [vmem:[#allocation2 + $0x198] sm:$0xff]
    %v148 = vld [vmem:[#allocation2 + $0x1a0] sm:$0xf]
    %v149 = vld [vmem:[#allocation2 + $0x1a4] sm:$0xff]
    %v150 = vld [vmem:[#allocation2 + $0x1ac] sm:$0xf]
    %v151 = vld [vmem:[#allocation2 + $0x1b0] sm:$0xff]
    %v152 = vld [vmem:[#allocation2 + $0x1b8] sm:$0xf]
    %v153 = vld [vmem:[#allocation2 + $0x1bc] sm:$0xff]
    %v154 = vld [vmem:[#allocation2 + $0x1c4] sm:$0xf]
    %v155 = vld [vmem:[#allocation2 + $0x1c8] sm:$0xff]
    %v156 = vld [vmem:[#allocation2 + $0x1d0] sm:$0xf]
    %v157 = vld [vmem:[#allocation2 + $0x1d4] sm:$0xff]
    %v158 = vld [vmem:[#allocation2 + $0x1dc] sm:$0xf]
    %v159 = vld [vmem:[#allocation2 + $0x1e0] sm:$0xff]
    %v160 = vld [vmem:[#allocation2 + $0x1e8] sm:$0xf]
    %v161 = vld [vmem:[#allocation2 + $0x1ec] sm:$0xff]
    %v162 = vld [vmem:[#allocation2 + $0x1f4] sm:$0xf]
    %v163 = vld [vmem:[#allocation2 + $0x1f8] sm:$0xff]
    %v164 = vld [vmem:[#allocation2 + $0x200] sm:$0xf]
    %v165 = vld [vmem:[#allocation2 + $0x204] sm:$0xff]
    %v166 = vld [vmem:[#allocation2 + $0x20c] sm:$0xf]
    %v167 = vld [vmem:[#allocation2 + $0x210] sm:$0xff]
    %v168 = vld [vmem:[#allocation2 + $0x218] sm:$0xf]
    %v169 = vld [vmem:[#allocation2 + $0x21c] sm:$0xff]
    %v170 = vld [vmem:[#allocation2 + $0x224] sm:$0xf]
    %v171 = vld [vmem:[#allocation2 + $0x228] sm:$0xff]
    %v172 = vld [vmem:[#allocation2 + $0x230] sm:$0xf]
    %v173 = vld [vmem:[#allocation2 + $0x234] sm:$0xff]
    %v174 = vld [vmem:[#allocation2 + $0x23c] sm:$0xf]
    %v175 = vld [vmem:[#allocation2 + $0x240] sm:$0xff]
    %v176 = vld [vmem:[#allocation2 + $0x248] sm:$0xf]
    %v177 = vld [vmem:[#allocation2 + $0x24c] sm:$0xff]
    %v178 = vld [vmem:[#allocation2 + $0x254] sm:$0xf]
    %v179 = vld [vmem:[#allocation2 + $0x258] sm:$0xff]
    %v180 = vld [vmem:[#allocation2 + $0x260] sm:$0xf]
    %v181 = vld [vmem:[#allocation2 + $0x264] sm:$0xff]
    %v182 = vld [vmem:[#allocation2 + $0x26c] sm:$0xf]
    %v183 = vld [vmem:[#allocation2 + $0x270] sm:$0xff]
    %v184 = vld [vmem:[#allocation2 + $0x278] sm:$0xf]
    %v185 = vld [vmem:[#allocation2 + $0x27c] sm:$0xff]
    %v186 = vld [vmem:[#allocation2 + $0x284] sm:$0xf]
    %v187 = vld [vmem:[#allocation2 + $0x288] sm:$0xff]
    %v188 = vld [vmem:[#allocation2 + $0x290] sm:$0xf]
    %v189 = vld [vmem:[#allocation2 + $0x294] sm:$0xff]
    %v190 = vld [vmem:[#allocation2 + $0x29c] sm:$0xf]
    %v191 = vld [vmem:[#allocation2 + $0x2a0] sm:$0xff]
    %v192 = vld [vmem:[#allocation2 + $0x2a8] sm:$0xf]
    %v193 = vld [vmem:[#allocation2 + $0x2ac] sm:$0xff]
    %v194 = vld [vmem:[#allocation2 + $0x2b4] sm:$0xf]
    %v195 = vld [vmem:[#allocation2 + $0x2b8] sm:$0xff]
    %v196 = vld [vmem:[#allocation2 + $0x2c0] sm:$0xf]
    %v197 = vld [vmem:[#allocation2 + $0x2c4] sm:$0xff]
    %v198 = vld [vmem:[#allocation2 + $0x2cc] sm:$0xf]
    %v199 = vld [vmem:[#allocation2 + $0x2d0] sm:$0xff]
    %v200 = vld [vmem:[#allocation2 + $0x2d8] sm:$0xf]
    %v201 = vld [vmem:[#allocation2 + $0x2dc] sm:$0xff]
    %v202 = vld [vmem:[#allocation2 + $0x2e4] sm:$0xf]
    %v203 = vld [vmem:[#allocation2 + $0x2e8] sm:$0xff]
    %v204 = vld [vmem:[#allocation2 + $0x2f0] sm:$0xf]
    %v205 = vld [vmem:[#allocation2 + $0x2f4] sm:$0xff]
    %v206 = vld [vmem:[#allocation2 + $0x2fc] sm:$0xf]
    %v207 = vld [vmem:[#allocation2 + $0x300] sm:$0xff]
    %v208 = vld [vmem:[#allocation2 + $0x308] sm:$0xf]
    %v209 = vld [vmem:[#allocation2 + $0x30c] sm:$0xff]
    %v210 = vld [vmem:[#allocation2 + $0x314] sm:$0xf]
    %v211 = vld [vmem:[#allocation2 + $0x318] sm:$0xff]
    %v212 = vld [vmem:[#allocation2 + $0x320] sm:$0xf]
    %v213 = vld [vmem:[#allocation2 + $0x324] sm:$0xff]
    %v214 = vld [vmem:[#allocation2 + $0x32c] sm:$0xf]
    %v215 = vld [vmem:[#allocation2 + $0x330] sm:$0xff]
    %v216 = vld [vmem:[#allocation2 + $0x338] sm:$0xf]
    %v217 = vld [vmem:[#allocation2 + $0x33c] sm:$0xff]
    %v218 = vld [vmem:[#allocation2 + $0x344] sm:$0xf]
    %v219 = vld [vmem:[#allocation2 + $0x348] sm:$0xff]
    %v220 = vld [vmem:[#allocation2 + $0x350] sm:$0xf]
    %v221 = vld [vmem:[#allocation2 + $0x354] sm:$0xff]
    %v222 = vld [vmem:[#allocation2 + $0x35c] sm:$0xf]
    %v223 = vld [vmem:[#allocation2 + $0x360] sm:$0xff]
    %v224 = vld [vmem:[#allocation2 + $0x368] sm:$0xf]
    %v225 = vld [vmem:[#allocation2 + $0x36c] sm:$0xff]
    %v226 = vld [vmem:[#allocation2 + $0x374] sm:$0xf]
    %v227 = vld [vmem:[#allocation2 + $0x378] sm:$0xff]
    %v228 = vld [vmem:[#allocation2 + $0x380] sm:$0xf]
    %v229 = vld [vmem:[#allocation2 + $0x384] sm:$0xff]
    %v230 = vld [vmem:[#allocation2 + $0x38c] sm:$0xf]
    %v231 = vld [vmem:[#allocation2 + $0x390] sm:$0xff]
    %v232 = vld [vmem:[#allocation2 + $0x398] sm:$0xf]
    %v233 = vld [vmem:[#allocation2 + $0x39c] sm:$0xff]
    %v234 = vld [vmem:[#allocation2 + $0x3a4] sm:$0xf]
    %v235 = vld [vmem:[#allocation2 + $0x3a8] sm:$0xff]
    %v236 = vld [vmem:[#allocation2 + $0x3b0] sm:$0xf]
    %v237 = vld [vmem:[#allocation2 + $0x3b4] sm:$0xff]
    %v238 = vld [vmem:[#allocation2 + $0x3bc] sm:$0xf]
    %v239 = vld [vmem:[#allocation2 + $0x3c0] sm:$0xff]
    %v240 = vld [vmem:[#allocation2 + $0x3c8] sm:$0xf]
    %v241 = vld [vmem:[#allocation2 + $0x3cc] sm:$0xff]
    %v242 = vld [vmem:[#allocation2 + $0x3d4] sm:$0xf]
    %v243 = vld [vmem:[#allocation2 + $0x3d8] sm:$0xff]
    %v244 = vld [vmem:[#allocation2 + $0x3e0] sm:$0xf]
    %v245 = vld [vmem:[#allocation2 + $0x3e4] sm:$0xff]
    %v246 = vld [vmem:[#allocation2 + $0x3ec] sm:$0xf]
    %v247 = vld [vmem:[#allocation2 + $0x3f0] sm:$0xff]
    %v248 = vld [vmem:[#allocation2 + $0x3f8] sm:$0xf]
    %v249 = vld [vmem:[#allocation2 + $0x3fc] sm:$0xff]
    %v250 = vld [vmem:[#allocation2 + $0x404] sm:$0xf]
    %v251 = vld [vmem:[#allocation2 + $0x408] sm:$0xff]
    %v252 = vld [vmem:[#allocation2 + $0x410] sm:$0xf]
    %v253 = vld [vmem:[#allocation2 + $0x414] sm:$0xff]
    %v254 = vld [vmem:[#allocation2 + $0x41c] sm:$0xf]
    %v255 = vld [vmem:[#allocation2 + $0x420] sm:$0xff]
    %v256 = vld [vmem:[#allocation2 + $0x428] sm:$0xf]
    %v257 = vld [vmem:[#allocation2 + $0x42c] sm:$0xff]
    %v258 = vld [vmem:[#allocation2 + $0x434] sm:$0xf]
    %v259 = vld [vmem:[#allocation2 + $0x438] sm:$0xff]
    %v260 = vld [vmem:[#allocation2 + $0x440] sm:$0xf]
    %v261 = vld [vmem:[#allocation2 + $0x444] sm:$0xff]
    %v262 = vld [vmem:[#allocation2 + $0x44c] sm:$0xf]
    %v263 = vld [vmem:[#allocation2 + $0x450] sm:$0xff]
    %v264 = vld [vmem:[#allocation2 + $0x458] sm:$0xf]
    %v265 = vld [vmem:[#allocation2 + $0x45c] sm:$0xff]
    %v266 = vld [vmem:[#allocation2 + $0x464] sm:$0xf]
    %v267 = vld [vmem:[#allocation2 + $0x468] sm:$0xff]
    %v268 = vld [vmem:[#allocation2 + $0x470] sm:$0xf]
    %v269 = vld [vmem:[#allocation2 + $0x474] sm:$0xff]
    %v270 = vld [vmem:[#allocation2 + $0x47c] sm:$0xf]
    %v271 = vld [vmem:[%s2] sm:$0x7]
    %v273 = vlaneseq
    %v274 = vshrl.u32 %v273, 7
    %v275 = vsub.s32 0, %v274
    %v276 = vrot.slane %v271, %v275
    %v277 = vlaneseq
    %v278 = vshrl.u32 %v277, 7
    %v279 = vsub.s32 1, %v278
    %v280 = vrot.slane %v271, %v279
    %v281 = vlaneseq
    %v282 = vshrl.u32 %v281, 7
    %v283 = vsub.s32 2, %v282
    %v284 = vrot.slane %v271, %v283
    %v294 = vunpack.c.l.b16 %v73
    %v295 = vunpack.c.h.b16 %v73
    %v296 = vunpack.c.l.b16 %v74
    %v297 = vunpack.c.h.b16 %v74
    %v298 = vunpack.c.l.b16 %v75
    %v299 = vunpack.c.h.b16 %v75
    %v300 = vunpack.c.l.b16 %v76
    %v301 = vunpack.c.h.b16 %v76
    %v302 = vunpack.c.l.b16 %v77
    %v303 = vunpack.c.h.b16 %v77
    %v304 = vunpack.c.l.b16 %v78
    %v305 = vunpack.c.h.b16 %v78
    %v306 = vpack.c.b16 %v300, %v294
    %v307 = vpack.c.b16 %v301, %v295
    %v308 = vpack.c.b16 %v302, %v296
    %v309 = vpack.c.b16 %v303, %v297
    %v310 = vpack.c.b16 %v304, %v298
    %v311 = vpack.c.b16 %v305, %v299
    %v510 = vunpack.c.l.b16 %v79
    %v511 = vunpack.c.h.b16 %v79
    %v512 = vunpack.c.l.b16 %v80
    %v513 = vunpack.c.l.b16 %v81
    %v514 = vunpack.c.h.b16 %v81
    %v515 = vunpack.c.l.b16 %v82
    %v516 = vunpack.c.l.b16 %v83
    %v517 = vunpack.c.h.b16 %v83
    %v518 = vunpack.c.l.b16 %v84
    %v519 = vunpack.c.l.b16 %v85
    %v520 = vunpack.c.h.b16 %v85
    %v521 = vunpack.c.l.b16 %v86
    %v522 = vunpack.c.l.b16 %v87
    %v523 = vunpack.c.h.b16 %v87
    %v524 = vunpack.c.l.b16 %v88
    %v525 = vunpack.c.l.b16 %v89
    %v526 = vunpack.c.h.b16 %v89
    %v527 = vunpack.c.l.b16 %v90
    %v528 = vunpack.c.l.b16 %v91
    %v529 = vunpack.c.h.b16 %v91
    %v530 = vunpack.c.l.b16 %v92
    %v531 = vunpack.c.l.b16 %v93
    %v532 = vunpack.c.h.b16 %v93
    %v533 = vunpack.c.l.b16 %v94
    %v534 = vunpack.c.l.b16 %v95
    %v535 = vunpack.c.h.b16 %v95
    %v536 = vunpack.c.l.b16 %v96
    %v537 = vunpack.c.l.b16 %v97
    %v538 = vunpack.c.h.b16 %v97
    %v539 = vunpack.c.l.b16 %v98
    %v540 = vunpack.c.l.b16 %v99
    %v541 = vunpack.c.h.b16 %v99
    %v542 = vunpack.c.l.b16 %v100
    %v543 = vunpack.c.l.b16 %v101
    %v544 = vunpack.c.h.b16 %v101
    %v545 = vunpack.c.l.b16 %v102
    %v546 = vunpack.c.l.b16 %v103
    %v547 = vunpack.c.h.b16 %v103
    %v548 = vunpack.c.l.b16 %v104
    %v549 = vunpack.c.l.b16 %v105
    %v550 = vunpack.c.h.b16 %v105
    %v551 = vunpack.c.l.b16 %v106
    %v552 = vunpack.c.l.b16 %v107
    %v553 = vunpack.c.h.b16 %v107
    %v554 = vunpack.c.l.b16 %v108
    %v555 = vunpack.c.l.b16 %v109
    %v556 = vunpack.c.h.b16 %v109
    %v557 = vunpack.c.l.b16 %v110
    %v558 = vunpack.c.l.b16 %v111
    %v559 = vunpack.c.h.b16 %v111
    %v560 = vunpack.c.l.b16 %v112
    %v561 = vunpack.c.l.b16 %v113
    %v562 = vunpack.c.h.b16 %v113
    %v563 = vunpack.c.l.b16 %v114
    %v564 = vunpack.c.l.b16 %v115
    %v565 = vunpack.c.h.b16 %v115
    %v566 = vunpack.c.l.b16 %v116
    %v567 = vunpack.c.l.b16 %v117
    %v568 = vunpack.c.h.b16 %v117
    %v569 = vunpack.c.l.b16 %v118
    %v570 = vunpack.c.l.b16 %v119
    %v571 = vunpack.c.h.b16 %v119
    %v572 = vunpack.c.l.b16 %v120
    %v573 = vunpack.c.l.b16 %v121
    %v574 = vunpack.c.h.b16 %v121
    %v575 = vunpack.c.l.b16 %v122
    %v576 = vunpack.c.l.b16 %v123
    %v577 = vunpack.c.h.b16 %v123
    %v578 = vunpack.c.l.b16 %v124
    %v579 = vunpack.c.l.b16 %v125
    %v580 = vunpack.c.h.b16 %v125
    %v581 = vunpack.c.l.b16 %v126
    %v582 = vunpack.c.l.b16 %v127
    %v583 = vunpack.c.h.b16 %v127
    %v584 = vunpack.c.l.b16 %v128
    %v585 = vunpack.c.l.b16 %v129
    %v586 = vunpack.c.h.b16 %v129
    %v587 = vunpack.c.l.b16 %v130
    %v588 = vunpack.c.l.b16 %v131
    %v589 = vunpack.c.h.b16 %v131
    %v590 = vunpack.c.l.b16 %v132
    %v591 = vunpack.c.l.b16 %v133
    %v592 = vunpack.c.h.b16 %v133
    %v593 = vunpack.c.l.b16 %v134
    %v594 = vunpack.c.l.b16 %v135
    %v595 = vunpack.c.h.b16 %v135
    %v596 = vunpack.c.l.b16 %v136
    %v597 = vunpack.c.l.b16 %v137
    %v598 = vunpack.c.h.b16 %v137
    %v599 = vunpack.c.l.b16 %v138
    %v600 = vunpack.c.l.b16 %v139
    %v601 = vunpack.c.h.b16 %v139
    %v602 = vunpack.c.l.b16 %v140
    %v603 = vunpack.c.l.b16 %v141
    %v604 = vunpack.c.h.b16 %v141
    %v605 = vunpack.c.l.b16 %v142
    %v606 = vunpack.c.l.b16 %v143
    %v607 = vunpack.c.h.b16 %v143
    %v608 = vunpack.c.l.b16 %v144
    %v609 = vunpack.c.l.b16 %v145
    %v610 = vunpack.c.h.b16 %v145
    %v611 = vunpack.c.l.b16 %v146
    %v612 = vunpack.c.l.b16 %v147
    %v613 = vunpack.c.h.b16 %v147
    %v614 = vunpack.c.l.b16 %v148
    %v615 = vunpack.c.l.b16 %v149
    %v616 = vunpack.c.h.b16 %v149
    %v617 = vunpack.c.l.b16 %v150
    %v618 = vunpack.c.l.b16 %v151
    %v619 = vunpack.c.h.b16 %v151
    %v620 = vunpack.c.l.b16 %v152
    %v621 = vunpack.c.l.b16 %v153
    %v622 = vunpack.c.h.b16 %v153
    %v623 = vunpack.c.l.b16 %v154
    %v624 = vunpack.c.l.b16 %v155
    %v625 = vunpack.c.h.b16 %v155
    %v626 = vunpack.c.l.b16 %v156
    %v627 = vunpack.c.l.b16 %v157
    %v628 = vunpack.c.h.b16 %v157
    %v629 = vunpack.c.l.b16 %v158
    %v630 = vunpack.c.l.b16 %v159
    %v631 = vunpack.c.h.b16 %v159
    %v632 = vunpack.c.l.b16 %v160
    %v633 = vunpack.c.l.b16 %v161
    %v634 = vunpack.c.h.b16 %v161
    %v635 = vunpack.c.l.b16 %v162
    %v636 = vunpack.c.l.b16 %v163
    %v637 = vunpack.c.h.b16 %v163
    %v638 = vunpack.c.l.b16 %v164
    %v639 = vunpack.c.l.b16 %v165
    %v640 = vunpack.c.h.b16 %v165
    %v641 = vunpack.c.l.b16 %v166
    %v642 = vunpack.c.l.b16 %v167
    %v643 = vunpack.c.h.b16 %v167
    %v644 = vunpack.c.l.b16 %v168
    %v645 = vunpack.c.l.b16 %v169
    %v646 = vunpack.c.h.b16 %v169
    %v647 = vunpack.c.l.b16 %v170
    %v648 = vunpack.c.l.b16 %v171
    %v649 = vunpack.c.h.b16 %v171
    %v650 = vunpack.c.l.b16 %v172
    %v651 = vunpack.c.l.b16 %v173
    %v652 = vunpack.c.h.b16 %v173
    %v653 = vunpack.c.l.b16 %v174
    %v654 = vunpack.c.l.b16 %v175
    %v655 = vunpack.c.h.b16 %v175
    %v656 = vunpack.c.l.b16 %v176
    %v657 = vunpack.c.l.b16 %v177
    %v658 = vunpack.c.h.b16 %v177
    %v659 = vunpack.c.l.b16 %v178
    %v660 = vunpack.c.l.b16 %v179
    %v661 = vunpack.c.h.b16 %v179
    %v662 = vunpack.c.l.b16 %v180
    %v663 = vunpack.c.l.b16 %v181
    %v664 = vunpack.c.h.b16 %v181
    %v665 = vunpack.c.l.b16 %v182
    %v666 = vunpack.c.l.b16 %v183
    %v667 = vunpack.c.h.b16 %v183
    %v668 = vunpack.c.l.b16 %v184
    %v669 = vunpack.c.l.b16 %v185
    %v670 = vunpack.c.h.b16 %v185
    %v671 = vunpack.c.l.b16 %v186
    %v672 = vunpack.c.l.b16 %v187
    %v673 = vunpack.c.h.b16 %v187
    %v674 = vunpack.c.l.b16 %v188
    %v675 = vunpack.c.l.b16 %v189
    %v676 = vunpack.c.h.b16 %v189
    %v677 = vunpack.c.l.b16 %v190
    %v678 = vunpack.c.l.b16 %v191
    %v679 = vunpack.c.h.b16 %v191
    %v680 = vunpack.c.l.b16 %v192
    %v681 = vunpack.c.l.b16 %v193
    %v682 = vunpack.c.h.b16 %v193
    %v683 = vunpack.c.l.b16 %v194
    %v684 = vunpack.c.l.b16 %v195
    %v685 = vunpack.c.h.b16 %v195
    %v686 = vunpack.c.l.b16 %v196
    %v687 = vunpack.c.l.b16 %v197
    %v688 = vunpack.c.h.b16 %v197
    %v689 = vunpack.c.l.b16 %v198
    %v690 = vunpack.c.l.b16 %v199
    %v691 = vunpack.c.h.b16 %v199
    %v692 = vunpack.c.l.b16 %v200
    %v693 = vunpack.c.l.b16 %v201
    %v694 = vunpack.c.h.b16 %v201
    %v695 = vunpack.c.l.b16 %v202
    %v696 = vunpack.c.l.b16 %v203
    %v697 = vunpack.c.h.b16 %v203
    %v698 = vunpack.c.l.b16 %v204
    %v699 = vunpack.c.l.b16 %v205
    %v700 = vunpack.c.h.b16 %v205
    %v701 = vunpack.c.l.b16 %v206
    %v702 = vunpack.c.l.b16 %v207
    %v703 = vunpack.c.h.b16 %v207
    %v704 = vunpack.c.l.b16 %v208
    %v705 = vunpack.c.l.b16 %v209
    %v706 = vunpack.c.h.b16 %v209
    %v707 = vunpack.c.l.b16 %v210
    %v708 = vunpack.c.l.b16 %v211
    %v709 = vunpack.c.h.b16 %v211
    %v710 = vunpack.c.l.b16 %v212
    %v711 = vunpack.c.l.b16 %v213
    %v712 = vunpack.c.h.b16 %v213
    %v713 = vunpack.c.l.b16 %v214
    %v714 = vunpack.c.l.b16 %v215
    %v715 = vunpack.c.h.b16 %v215
    %v716 = vunpack.c.l.b16 %v216
    %v717 = vunpack.c.l.b16 %v217
    %v718 = vunpack.c.h.b16 %v217
    %v719 = vunpack.c.l.b16 %v218
    %v720 = vunpack.c.l.b16 %v219
    %v721 = vunpack.c.h.b16 %v219
    %v722 = vunpack.c.l.b16 %v220
    %v723 = vunpack.c.l.b16 %v221
    %v724 = vunpack.c.h.b16 %v221
    %v725 = vunpack.c.l.b16 %v222
    %v726 = vunpack.c.l.b16 %v223
    %v727 = vunpack.c.h.b16 %v223
    %v728 = vunpack.c.l.b16 %v224
    %v729 = vunpack.c.l.b16 %v225
    %v730 = vunpack.c.h.b16 %v225
    %v731 = vunpack.c.l.b16 %v226
    %v732 = vunpack.c.l.b16 %v227
    %v733 = vunpack.c.h.b16 %v227
    %v734 = vunpack.c.l.b16 %v228
    %v735 = vunpack.c.l.b16 %v229
    %v736 = vunpack.c.h.b16 %v229
    %v737 = vunpack.c.l.b16 %v230
    %v738 = vunpack.c.l.b16 %v231
    %v739 = vunpack.c.h.b16 %v231
    %v740 = vunpack.c.l.b16 %v232
    %v741 = vunpack.c.l.b16 %v233
    %v742 = vunpack.c.h.b16 %v233
    %v743 = vunpack.c.l.b16 %v234
    %v744 = vunpack.c.l.b16 %v235
    %v745 = vunpack.c.h.b16 %v235
    %v746 = vunpack.c.l.b16 %v236
    %v747 = vunpack.c.l.b16 %v237
    %v748 = vunpack.c.h.b16 %v237
    %v749 = vunpack.c.l.b16 %v238
    %v750 = vunpack.c.l.b16 %v239
    %v751 = vunpack.c.h.b16 %v239
    %v752 = vunpack.c.l.b16 %v240
    %v753 = vunpack.c.l.b16 %v241
    %v754 = vunpack.c.h.b16 %v241
    %v755 = vunpack.c.l.b16 %v242
    %v756 = vunpack.c.l.b16 %v243
    %v757 = vunpack.c.h.b16 %v243
    %v758 = vunpack.c.l.b16 %v244
    %v759 = vunpack.c.l.b16 %v245
    %v760 = vunpack.c.h.b16 %v245
    %v761 = vunpack.c.l.b16 %v246
    %v762 = vunpack.c.l.b16 %v247
    %v763 = vunpack.c.h.b16 %v247
    %v764 = vunpack.c.l.b16 %v248
    %v765 = vunpack.c.l.b16 %v249
    %v766 = vunpack.c.h.b16 %v249
    %v767 = vunpack.c.l.b16 %v250
    %v768 = vunpack.c.l.b16 %v251
    %v769 = vunpack.c.h.b16 %v251
    %v770 = vunpack.c.l.b16 %v252
    %v771 = vunpack.c.l.b16 %v253
    %v772 = vunpack.c.h.b16 %v253
    %v773 = vunpack.c.l.b16 %v254
    %v774 = vunpack.c.l.b16 %v255
    %v775 = vunpack.c.h.b16 %v255
    %v776 = vunpack.c.l.b16 %v256
    %v777 = vunpack.c.l.b16 %v257
    %v778 = vunpack.c.h.b16 %v257
    %v779 = vunpack.c.l.b16 %v258
    %v780 = vunpack.c.l.b16 %v259
    %v781 = vunpack.c.h.b16 %v259
    %v782 = vunpack.c.l.b16 %v260
    %v783 = vunpack.c.l.b16 %v261
    %v784 = vunpack.c.h.b16 %v261
    %v785 = vunpack.c.l.b16 %v262
    %v786 = vunpack.c.l.b16 %v263
    %v787 = vunpack.c.h.b16 %v263
    %v788 = vunpack.c.l.b16 %v264
    %v789 = vunpack.c.l.b16 %v265
    %v790 = vunpack.c.h.b16 %v265
    %v791 = vunpack.c.l.b16 %v266
    %v792 = vunpack.c.l.b16 %v267
    %v793 = vunpack.c.h.b16 %v267
    %v794 = vunpack.c.l.b16 %v268
    %v795 = vunpack.c.l.b16 %v269
    %v796 = vunpack.c.h.b16 %v269
    %v797 = vunpack.c.l.b16 %v270
    %v798 = vpack.c.b16 %v513, %v510
    %v799 = vpack.c.b16 %v514, %v511
    %v800 = vpack.c.b16 %v515, %v512
    %v801 = vpack.c.b16 %v519, %v516
    %v802 = vpack.c.b16 %v520, %v517
    %v803 = vpack.c.b16 %v521, %v518
    %v804 = vpack.c.b16 %v525, %v522
    %v805 = vpack.c.b16 %v526, %v523
    %v806 = vpack.c.b16 %v527, %v524
    %v807 = vpack.c.b16 %v531, %v528
    %v808 = vpack.c.b16 %v532, %v529
    %v809 = vpack.c.b16 %v533, %v530
    %v810 = vpack.c.b16 %v537, %v534
    %v811 = vpack.c.b16 %v538, %v535
    %v812 = vpack.c.b16 %v539, %v536
    %v813 = vpack.c.b16 %v543, %v540
    %v814 = vpack.c.b16 %v544, %v541
    %v815 = vpack.c.b16 %v545, %v542
    %v816 = vpack.c.b16 %v549, %v546
    %v817 = vpack.c.b16 %v550, %v547
    %v818 = vpack.c.b16 %v551, %v548
    %v819 = vpack.c.b16 %v555, %v552
    %v820 = vpack.c.b16 %v556, %v553
    %v821 = vpack.c.b16 %v557, %v554
    %v822 = vpack.c.b16 %v561, %v558
    %v823 = vpack.c.b16 %v562, %v559
    %v824 = vpack.c.b16 %v563, %v560
    %v825 = vpack.c.b16 %v567, %v564
    %v826 = vpack.c.b16 %v568, %v565
    %v827 = vpack.c.b16 %v569, %v566
    %v828 = vpack.c.b16 %v573, %v570
    %v829 = vpack.c.b16 %v574, %v571
    %v830 = vpack.c.b16 %v575, %v572
    %v831 = vpack.c.b16 %v579, %v576
    %v832 = vpack.c.b16 %v580, %v577
    %v833 = vpack.c.b16 %v581, %v578
    %v834 = vpack.c.b16 %v585, %v582
    %v835 = vpack.c.b16 %v586, %v583
    %v836 = vpack.c.b16 %v587, %v584
    %v837 = vpack.c.b16 %v591, %v588
    %v838 = vpack.c.b16 %v592, %v589
    %v839 = vpack.c.b16 %v593, %v590
    %v840 = vpack.c.b16 %v597, %v594
    %v841 = vpack.c.b16 %v598, %v595
    %v842 = vpack.c.b16 %v599, %v596
    %v843 = vpack.c.b16 %v603, %v600
    %v844 = vpack.c.b16 %v604, %v601
    %v845 = vpack.c.b16 %v605, %v602
    %v846 = vpack.c.b16 %v609, %v606
    %v847 = vpack.c.b16 %v610, %v607
    %v848 = vpack.c.b16 %v611, %v608
    %v849 = vpack.c.b16 %v615, %v612
    %v850 = vpack.c.b16 %v616, %v613
    %v851 = vpack.c.b16 %v617, %v614
    %v852 = vpack.c.b16 %v621, %v618
    %v853 = vpack.c.b16 %v622, %v619
    %v854 = vpack.c.b16 %v623, %v620
    %v855 = vpack.c.b16 %v627, %v624
    %v856 = vpack.c.b16 %v628, %v625
    %v857 = vpack.c.b16 %v629, %v626
    %v858 = vpack.c.b16 %v633, %v630
    %v859 = vpack.c.b16 %v634, %v631
    %v860 = vpack.c.b16 %v635, %v632
    %v861 = vpack.c.b16 %v639, %v636
    %v862 = vpack.c.b16 %v640, %v637
    %v863 = vpack.c.b16 %v641, %v638
    %v864 = vpack.c.b16 %v645, %v642
    %v865 = vpack.c.b16 %v646, %v643
    %v866 = vpack.c.b16 %v647, %v644
    %v867 = vpack.c.b16 %v651, %v648
    %v868 = vpack.c.b16 %v652, %v649
    %v869 = vpack.c.b16 %v653, %v650
    %v870 = vpack.c.b16 %v657, %v654
    %v871 = vpack.c.b16 %v658, %v655
    %v872 = vpack.c.b16 %v659, %v656
    %v873 = vpack.c.b16 %v663, %v660
    %v874 = vpack.c.b16 %v664, %v661
    %v875 = vpack.c.b16 %v665, %v662
    %v876 = vpack.c.b16 %v669, %v666
    %v877 = vpack.c.b16 %v670, %v667
    %v878 = vpack.c.b16 %v671, %v668
    %v879 = vpack.c.b16 %v675, %v672
    %v880 = vpack.c.b16 %v676, %v673
    %v881 = vpack.c.b16 %v677, %v674
    %v882 = vpack.c.b16 %v681, %v678
    %v883 = vpack.c.b16 %v682, %v679
    %v884 = vpack.c.b16 %v683, %v680
    %v885 = vpack.c.b16 %v687, %v684
    %v886 = vpack.c.b16 %v688, %v685
    %v887 = vpack.c.b16 %v689, %v686
    %v888 = vpack.c.b16 %v693, %v690
    %v889 = vpack.c.b16 %v694, %v691
    %v890 = vpack.c.b16 %v695, %v692
    %v891 = vpack.c.b16 %v699, %v696
    %v892 = vpack.c.b16 %v700, %v697
    %v893 = vpack.c.b16 %v701, %v698
    %v894 = vpack.c.b16 %v705, %v702
    %v895 = vpack.c.b16 %v706, %v703
    %v896 = vpack.c.b16 %v707, %v704
    %v897 = vpack.c.b16 %v711, %v708
    %v898 = vpack.c.b16 %v712, %v709
    %v899 = vpack.c.b16 %v713, %v710
    %v900 = vpack.c.b16 %v717, %v714
    %v901 = vpack.c.b16 %v718, %v715
    %v902 = vpack.c.b16 %v719, %v716
    %v903 = vpack.c.b16 %v723, %v720
    %v904 = vpack.c.b16 %v724, %v721
    %v905 = vpack.c.b16 %v725, %v722
    %v906 = vpack.c.b16 %v729, %v726
    %v907 = vpack.c.b16 %v730, %v727
    %v908 = vpack.c.b16 %v731, %v728
    %v909 = vpack.c.b16 %v735, %v732
    %v910 = vpack.c.b16 %v736, %v733
    %v911 = vpack.c.b16 %v737, %v734
    %v912 = vpack.c.b16 %v741, %v738
    %v913 = vpack.c.b16 %v742, %v739
    %v914 = vpack.c.b16 %v743, %v740
    %v915 = vpack.c.b16 %v747, %v744
    %v916 = vpack.c.b16 %v748, %v745
    %v917 = vpack.c.b16 %v749, %v746
    %v918 = vpack.c.b16 %v753, %v750
    %v919 = vpack.c.b16 %v754, %v751
    %v920 = vpack.c.b16 %v755, %v752
    %v921 = vpack.c.b16 %v759, %v756
    %v922 = vpack.c.b16 %v760, %v757
    %v923 = vpack.c.b16 %v761, %v758
    %v924 = vpack.c.b16 %v765, %v762
    %v925 = vpack.c.b16 %v766, %v763
    %v926 = vpack.c.b16 %v767, %v764
    %v927 = vpack.c.b16 %v771, %v768
    %v928 = vpack.c.b16 %v772, %v769
    %v929 = vpack.c.b16 %v773, %v770
    %v930 = vpack.c.b16 %v777, %v774
    %v931 = vpack.c.b16 %v778, %v775
    %v932 = vpack.c.b16 %v779, %v776
    %v933 = vpack.c.b16 %v783, %v780
    %v934 = vpack.c.b16 %v784, %v781
    %v935 = vpack.c.b16 %v785, %v782
    %v936 = vpack.c.b16 %v789, %v786
    %v937 = vpack.c.b16 %v790, %v787
    %v938 = vpack.c.b16 %v791, %v788
    %v939 = vpack.c.b16 %v795, %v792
    %v940 = vpack.c.b16 %v796, %v793
    %v941 = vpack.c.b16 %v797, %v794
    %1086 = vmatprep.subr.bf16.mxu0 %v820
    %1087 = vmatpush1.bf16.msra.mxu0 %v819
    %1088 = vmatprep.subr.bf16.mxu0 %v817
    %1089 = vmatpush1.bf16.msra.mxu0 %v816
    %1090 = vmatprep.subr.bf16.mxu0 %v814
    %1091 = vmatpush1.bf16.msra.mxu0 %v813
    %1092 = vmatprep.subr.bf16.mxu0 %v811
    %1093 = vmatpush1.bf16.msra.mxu0 %v810
    %1094 = vmatprep.subr.bf16.mxu0 %v808
    %1095 = vmatpush1.bf16.msra.mxu0 %v807
    %1096 = vmatprep.subr.bf16.mxu0 %v805
    %1097 = vmatpush1.bf16.msra.mxu0 %v804
    %1098 = vmatprep.subr.bf16.mxu0 %v802
    %1099 = vmatpush1.bf16.msra.mxu0 %v801
    %1100 = vmatprep.subr.bf16.mxu0 %v799
    %1101 = vmatpush1.bf16.msra.mxu0 %v798
    %1102 = vmatprep.subr.bf16.mxu0 %v844
    %1103 = vmatpush2.bf16.msra.mxu0 %v843
    %1104 = vmatprep.subr.bf16.mxu0 %v841
    %1105 = vmatpush2.bf16.msra.mxu0 %v840
    %1106 = vmatprep.subr.bf16.mxu0 %v838
    %1107 = vmatpush2.bf16.msra.mxu0 %v837
    %1108 = vmatprep.subr.bf16.mxu0 %v835
    %1109 = vmatpush2.bf16.msra.mxu0 %v834
    %1110 = vmatprep.subr.bf16.mxu0 %v832
    %1111 = vmatpush2.bf16.msra.mxu0 %v831
    %1112 = vmatprep.subr.bf16.mxu0 %v829
    %1113 = vmatpush2.bf16.msra.mxu0 %v828
    %1114 = vmatprep.subr.bf16.mxu0 %v826
    %1115 = vmatpush2.bf16.msra.mxu0 %v825
    %1116 = vmatprep.subr.bf16.mxu0 %v823
    %1117 = vmatpush2.bf16.msra.mxu0 %v822
    %1118 = vmatprep.mubr.bf16.mxu0 %v307
    %1119 = vmatmul.mubr.bf16.gmra.mxu0 %v306
    %v1120 = vpop.f32.mrf.mxu0
    %v1121 = vadd.f32 %v276, %v1120
    %v1122 = vpop.f32.mrf.mxu0
    %v1123 = vadd.f32 %v280, %v1122
    %v1124 = vpop.f32.mrf.mxu0
    %v1125 = vadd.f32 %v276, %v1124
    %v1126 = vpop.f32.mrf.mxu0
    %v1127 = vadd.f32 %v280, %v1126
    %1128 = vdwg.mxu0
    %1129 = vmatprep.subr.bf16.mxu0 %v868
    %1130 = vmatpush1.bf16.msra.mxu0 %v867
    %1131 = vmatprep.subr.bf16.mxu0 %v865
    %1132 = vmatpush1.bf16.msra.mxu0 %v864
    %1133 = vmatprep.subr.bf16.mxu0 %v862
    %1134 = vmatpush1.bf16.msra.mxu0 %v861
    %1135 = vmatprep.subr.bf16.mxu0 %v859
    %1136 = vmatpush1.bf16.msra.mxu0 %v858
    %1137 = vmatprep.subr.bf16.mxu0 %v856
    %1138 = vmatpush1.bf16.msra.mxu0 %v855
    %1139 = vmatprep.subr.bf16.mxu0 %v853
    %1140 = vmatpush1.bf16.msra.mxu0 %v852
    %1141 = vmatprep.subr.bf16.mxu0 %v850
    %1142 = vmatpush1.bf16.msra.mxu0 %v849
    %1143 = vmatprep.subr.bf16.mxu0 %v847
    %1144 = vmatpush1.bf16.msra.mxu0 %v846
    %1145 = vmatprep.subr.bf16.mxu0 %v892
    %1146 = vmatpush2.bf16.msra.mxu0 %v891
    %1147 = vmatprep.subr.bf16.mxu0 %v889
    %1148 = vmatpush2.bf16.msra.mxu0 %v888
    %1149 = vmatprep.subr.bf16.mxu0 %v886
    %1150 = vmatpush2.bf16.msra.mxu0 %v885
    %1151 = vmatprep.subr.bf16.mxu0 %v883
    %1152 = vmatpush2.bf16.msra.mxu0 %v882
    %1153 = vmatprep.subr.bf16.mxu0 %v880
    %1154 = vmatpush2.bf16.msra.mxu0 %v879
    %1155 = vmatprep.subr.bf16.mxu0 %v877
    %1156 = vmatpush2.bf16.msra.mxu0 %v876
    %1157 = vmatprep.subr.bf16.mxu0 %v874
    %1158 = vmatpush2.bf16.msra.mxu0 %v873
    %1159 = vmatprep.subr.bf16.mxu0 %v871
    %1160 = vmatpush2.bf16.msra.mxu0 %v870
    %1161 = vmatprep.mubr.bf16.mxu0 %v309
    %1162 = vmatmul.mubr.bf16.gmra.mxu0 %v308
    %v1163 = vpop.f32.mrf.mxu0
    %v1164 = vadd.f32 %v1121, %v1163
    %v1165 = vpop.f32.mrf.mxu0
    %v1166 = vadd.f32 %v1123, %v1165
    %v1167 = vpop.f32.mrf.mxu0
    %v1168 = vadd.f32 %v1125, %v1167
    %v1169 = vpop.f32.mrf.mxu0
    %v1170 = vadd.f32 %v1127, %v1169
    %1171 = vdwg.mxu0
    %1172 = vmatprep.subr.bf16.mxu0 %v916
    %1173 = vmatpush1.bf16.msra.mxu0 %v915
    %1174 = vmatprep.subr.bf16.mxu0 %v913
    %1175 = vmatpush1.bf16.msra.mxu0 %v912
    %1176 = vmatprep.subr.bf16.mxu0 %v910
    %1177 = vmatpush1.bf16.msra.mxu0 %v909
    %1178 = vmatprep.subr.bf16.mxu0 %v907
    %1179 = vmatpush1.bf16.msra.mxu0 %v906
    %1180 = vmatprep.subr.bf16.mxu0 %v904
    %1181 = vmatpush1.bf16.msra.mxu0 %v903
    %1182 = vmatprep.subr.bf16.mxu0 %v901
    %1183 = vmatpush1.bf16.msra.mxu0 %v900
    %1184 = vmatprep.subr.bf16.mxu0 %v898
    %1185 = vmatpush1.bf16.msra.mxu0 %v897
    %1186 = vmatprep.subr.bf16.mxu0 %v895
    %1187 = vmatpush1.bf16.msra.mxu0 %v894
    %1188 = vmatprep.subr.bf16.mxu0 %v940
    %1189 = vmatpush2.bf16.msra.mxu0 %v939
    %1190 = vmatprep.subr.bf16.mxu0 %v937
    %1191 = vmatpush2.bf16.msra.mxu0 %v936
    %1192 = vmatprep.subr.bf16.mxu0 %v934
    %1193 = vmatpush2.bf16.msra.mxu0 %v933
    %1194 = vmatprep.subr.bf16.mxu0 %v931
    %1195 = vmatpush2.bf16.msra.mxu0 %v930
    %1196 = vmatprep.subr.bf16.mxu0 %v928
    %1197 = vmatpush2.bf16.msra.mxu0 %v927
    %1198 = vmatprep.subr.bf16.mxu0 %v925
    %1199 = vmatpush2.bf16.msra.mxu0 %v924
    %1200 = vmatprep.subr.bf16.mxu0 %v922
    %1201 = vmatpush2.bf16.msra.mxu0 %v921
    %1202 = vmatprep.subr.bf16.mxu0 %v919
    %1203 = vmatpush2.bf16.msra.mxu0 %v918
    %1204 = vmatprep.mubr.bf16.mxu0 %v311
    %1205 = vmatmul.mubr.bf16.gmra.mxu0 %v310
    %v1206 = vpop.f32.mrf.mxu0
    %v1207 = vadd.f32 %v1164, %v1206
    %v1208 = vpop.f32.mrf.mxu0
    %v1209 = vadd.f32 %v1166, %v1208
    %v1210 = vpop.f32.mrf.mxu0
    %v1211 = vadd.f32 %v1168, %v1210
    %v1212 = vpop.f32.mrf.mxu0
    %v1213 = vadd.f32 %v1170, %v1212
    %1214 = vdwg.mxu0
    %1215 = vmatprep.subr.bf16.mxu0 0
    %1216 = vmatpush1.bf16.msra.mxu0 %v821
    %1217 = vmatprep.subr.bf16.mxu0 0
    %1218 = vmatpush1.bf16.msra.mxu0 %v818
    %1219 = vmatprep.subr.bf16.mxu0 0
    %1220 = vmatpush1.bf16.msra.mxu0 %v815
    %1221 = vmatprep.subr.bf16.mxu0 0
    %1222 = vmatpush1.bf16.msra.mxu0 %v812
    %1223 = vmatprep.subr.bf16.mxu0 0
    %1224 = vmatpush1.bf16.msra.mxu0 %v809
    %1225 = vmatprep.subr.bf16.mxu0 0
    %1226 = vmatpush1.bf16.msra.mxu0 %v806
    %1227 = vmatprep.subr.bf16.mxu0 0
    %1228 = vmatpush1.bf16.msra.mxu0 %v803
    %1229 = vmatprep.subr.bf16.mxu0 0
    %1230 = vmatpush1.bf16.msra.mxu0 %v800
    %1231 = vmatprep.subr.bf16.mxu0 0
    %1232 = vmatpush2.bf16.msra.mxu0 %v845
    %1233 = vmatprep.subr.bf16.mxu0 0
    %1234 = vmatpush2.bf16.msra.mxu0 %v842
    %1235 = vmatprep.subr.bf16.mxu0 0
    %1236 = vmatpush2.bf16.msra.mxu0 %v839
    %1237 = vmatprep.subr.bf16.mxu0 0
    %1238 = vmatpush2.bf16.msra.mxu0 %v836
    %1239 = vmatprep.subr.bf16.mxu0 0
    %1240 = vmatpush2.bf16.msra.mxu0 %v833
    %1241 = vmatprep.subr.bf16.mxu0 0
    %1242 = vmatpush2.bf16.msra.mxu0 %v830
    %1243 = vmatprep.subr.bf16.mxu0 0
    %1244 = vmatpush2.bf16.msra.mxu0 %v827
    %1245 = vmatprep.subr.bf16.mxu0 0
    %1246 = vmatpush2.bf16.msra.mxu0 %v824
    %1247 = vmatprep.mubr.bf16.mxu0 %v307
    %1248 = vmatmul.mubr.bf16.gmra.mxu0 %v306
    %v1249 = vpop.f32.mrf.mxu0
    %v1250 = vadd.f32 %v284, %v1249
    %v1251 = vpop.f32.mrf.mxu0
    %v1252 = vpop.f32.mrf.mxu0
    %v1253 = vadd.f32 %v284, %v1252
    %v1254 = vpop.f32.mrf.mxu0
    %1255 = vdwg.mxu0
    %1256 = vmatprep.subr.bf16.mxu0 0
    %1257 = vmatpush1.bf16.msra.mxu0 %v869
    %1258 = vmatprep.subr.bf16.mxu0 0
    %1259 = vmatpush1.bf16.msra.mxu0 %v866
    %1260 = vmatprep.subr.bf16.mxu0 0
    %1261 = vmatpush1.bf16.msra.mxu0 %v863
    %1262 = vmatprep.subr.bf16.mxu0 0
    %1263 = vmatpush1.bf16.msra.mxu0 %v860
    %1264 = vmatprep.subr.bf16.mxu0 0
    %1265 = vmatpush1.bf16.msra.mxu0 %v857
    %1266 = vmatprep.subr.bf16.mxu0 0
    %1267 = vmatpush1.bf16.msra.mxu0 %v854
    %1268 = vmatprep.subr.bf16.mxu0 0
    %1269 = vmatpush1.bf16.msra.mxu0 %v851
    %1270 = vmatprep.subr.bf16.mxu0 0
    %1271 = vmatpush1.bf16.msra.mxu0 %v848
    %1272 = vmatprep.subr.bf16.mxu0 0
    %1273 = vmatpush2.bf16.msra.mxu0 %v893
    %1274 = vmatprep.subr.bf16.mxu0 0
    %1275 = vmatpush2.bf16.msra.mxu0 %v890
    %1276 = vmatprep.subr.bf16.mxu0 0
    %1277 = vmatpush2.bf16.msra.mxu0 %v887
    %1278 = vmatprep.subr.bf16.mxu0 0
    %1279 = vmatpush2.bf16.msra.mxu0 %v884
    %1280 = vmatprep.subr.bf16.mxu0 0
    %1281 = vmatpush2.bf16.msra.mxu0 %v881
    %1282 = vmatprep.subr.bf16.mxu0 0
    %1283 = vmatpush2.bf16.msra.mxu0 %v878
    %1284 = vmatprep.subr.bf16.mxu0 0
    %1285 = vmatpush2.bf16.msra.mxu0 %v875
    %1286 = vmatprep.subr.bf16.mxu0 0
    %1287 = vmatpush2.bf16.msra.mxu0 %v872
    %1288 = vmatprep.mubr.bf16.mxu0 %v309
    %1289 = vmatmul.mubr.bf16.gmra.mxu0 %v308
    %v1290 = vpop.f32.mrf.mxu0
    %v1291 = vadd.f32 %v1250, %v1290
    %v1292 = vpop.f32.mrf.mxu0
    %v1293 = vpop.f32.mrf.mxu0
    %v1294 = vadd.f32 %v1253, %v1293
    %v1295 = vpop.f32.mrf.mxu0
    %1296 = vdwg.mxu0
    %1297 = vmatprep.subr.bf16.mxu0 0
    %1298 = vmatpush1.bf16.msra.mxu0 %v917
    %1299 = vmatprep.subr.bf16.mxu0 0
    %1300 = vmatpush1.bf16.msra.mxu0 %v914
    %1301 = vmatprep.subr.bf16.mxu0 0
    %1302 = vmatpush1.bf16.msra.mxu0 %v911
    %1303 = vmatprep.subr.bf16.mxu0 0
    %1304 = vmatpush1.bf16.msra.mxu0 %v908
    %1305 = vmatprep.subr.bf16.mxu0 0
    %1306 = vmatpush1.bf16.msra.mxu0 %v905
    %1307 = vmatprep.subr.bf16.mxu0 0
    %1308 = vmatpush1.bf16.msra.mxu0 %v902
    %1309 = vmatprep.subr.bf16.mxu0 0
    %1310 = vmatpush1.bf16.msra.mxu0 %v899
    %1311 = vmatprep.subr.bf16.mxu0 0
    %1312 = vmatpush1.bf16.msra.mxu0 %v896
    %1313 = vmatprep.subr.bf16.mxu0 0
    %1314 = vmatpush2.bf16.msra.mxu0 %v941
    %1315 = vmatprep.subr.bf16.mxu0 0
    %1316 = vmatpush2.bf16.msra.mxu0 %v938
    %1317 = vmatprep.subr.bf16.mxu0 0
    %1318 = vmatpush2.bf16.msra.mxu0 %v935
    %1319 = vmatprep.subr.bf16.mxu0 0
    %1320 = vmatpush2.bf16.msra.mxu0 %v932
    %1321 = vmatprep.subr.bf16.mxu0 0
    %1322 = vmatpush2.bf16.msra.mxu0 %v929
    %1323 = vmatprep.subr.bf16.mxu0 0
    %1324 = vmatpush2.bf16.msra.mxu0 %v926
    %1325 = vmatprep.subr.bf16.mxu0 0
    %1326 = vmatpush2.bf16.msra.mxu0 %v923
    %1327 = vmatprep.subr.bf16.mxu0 0
    %1328 = vmatpush2.bf16.msra.mxu0 %v920
    %1329 = vmatprep.mubr.bf16.mxu0 %v311
    %1330 = vmatmul.mubr.bf16.gmra.mxu0 %v310
    %v1331 = vpop.f32.mrf.mxu0
    %v1332 = vadd.f32 %v1291, %v1331
    %v1333 = vpop.f32.mrf.mxu0
    %v1334 = vpop.f32.mrf.mxu0
    %v1335 = vadd.f32 %v1294, %v1334
    %v1336 = vpop.f32.mrf.mxu0
    %1337 = vdwg.mxu0
    %v1338 = vmax.f32 %v1207, 0.0
    %v1339 = vmax.f32 %v1209, 0.0
    %v1340 = vmax.f32 %v1332, 0.0
    %v1341 = vmax.f32 %v1211, 0.0
    %v1342 = vmax.f32 %v1213, 0.0
    %v1343 = vmax.f32 %v1335, 0.0
    %v1344 = vpack.c.bf16 %v1343, %v1340
    %v1345 = vld [vmem:[%s3] sm:$0xf]
    %v1346 = vld [vmem:[%s3 + $0x4] sm:$0xf]
    %v1347 = vld [vmem:[%s3 + $0x8] sm:$0xf]
    %v1348 = vld [vmem:[%s3 + $0xc] sm:$0xf]
    %v1349 = vld [vmem:[%s3 + $0x10] sm:$0xf]
    %v1350 = vld [vmem:[%s3 + $0x14] sm:$0xf]
    %v1351 = vld [vmem:[%s3 + $0x18] sm:$0xf]
    %v1352 = vld [vmem:[%s3 + $0x1c] sm:$0xf]
    %v1353 = vld [vmem:[%s3 + $0x20] sm:$0xf]
    %v1354 = vld [vmem:[%s3 + $0x24] sm:$0xf]
    %v1355 = vld [vmem:[%s3 + $0x28] sm:$0xf]
    %v1356 = vld [vmem:[%s3 + $0x2c] sm:$0xf]
    %v1357 = vld [vmem:[%s3 + $0x30] sm:$0xf]
    %v1358 = vld [vmem:[%s3 + $0x34] sm:$0xf]
    %v1359 = vld [vmem:[%s3 + $0x38] sm:$0xf]
    %v1360 = vld [vmem:[%s3 + $0x3c] sm:$0xf]
    %v1361 = vld [vmem:[%s4] sm:$0x1]
    %v1363 = vlaneseq
    %v1364 = vshrl.u32 %v1363, 7
    %v1365 = vsub.s32 0, %v1364
    %v1366 = vrot.slane %v1361, %v1365
    %v1384 = vunpack.c.l.b16 %v1345
    %v1385 = vunpack.c.l.b16 %v1346
    %v1386 = vunpack.c.l.b16 %v1347
    %v1387 = vunpack.c.l.b16 %v1348
    %v1388 = vunpack.c.l.b16 %v1349
    %v1389 = vunpack.c.l.b16 %v1350
    %v1390 = vunpack.c.l.b16 %v1351
    %v1391 = vunpack.c.l.b16 %v1352
    %v1392 = vunpack.c.l.b16 %v1353
    %v1393 = vunpack.c.l.b16 %v1354
    %v1394 = vunpack.c.l.b16 %v1355
    %v1395 = vunpack.c.l.b16 %v1356
    %v1396 = vunpack.c.l.b16 %v1357
    %v1397 = vunpack.c.l.b16 %v1358
    %v1398 = vunpack.c.l.b16 %v1359
    %v1399 = vunpack.c.l.b16 %v1360
    %v1400 = vpack.c.b16 %v1385, %v1384
    %v1401 = vpack.c.b16 %v1387, %v1386
    %v1402 = vpack.c.b16 %v1389, %v1388
    %v1403 = vpack.c.b16 %v1391, %v1390
    %v1404 = vpack.c.b16 %v1393, %v1392
    %v1405 = vpack.c.b16 %v1395, %v1394
    %v1406 = vpack.c.b16 %v1397, %v1396
    %v1407 = vpack.c.b16 %v1399, %v1398
    %1416 = vmatprep.subr.bf16.mxu0 0
    %1417 = vmatpush1.bf16.msra.mxu0 %v1407
    %1418 = vmatprep.subr.bf16.mxu0 0
    %1419 = vmatpush1.bf16.msra.mxu0 %v1406
    %1420 = vmatprep.subr.bf16.mxu0 0
    %1421 = vmatpush1.bf16.msra.mxu0 %v1405
    %1422 = vmatprep.subr.bf16.mxu0 0
    %1423 = vmatpush1.bf16.msra.mxu0 %v1404
    %1424 = vmatprep.subr.bf16.mxu0 0
    %1425 = vmatpush1.bf16.msra.mxu0 %v1403
    %1426 = vmatprep.subr.bf16.mxu0 0
    %1427 = vmatpush1.bf16.msra.mxu0 %v1402
    %1428 = vmatprep.subr.bf16.mxu0 0
    %1429 = vmatpush1.bf16.msra.mxu0 %v1401
    %1430 = vmatprep.subr.bf16.mxu0 0
    %1431 = vmatpush1.bf16.msra.mxu0 %v1400
    %1432 = vmatprep.subr.bf16.mxu0 0
    %1433 = vmatpush2.bf16.msra.mxu0 0
    %1434 = vmatprep.subr.bf16.mxu0 0
    %1435 = vmatpush2.bf16.msra.mxu0 0
    %1436 = vmatprep.subr.bf16.mxu0 0
    %1437 = vmatpush2.bf16.msra.mxu0 0
    %1438 = vmatprep.subr.bf16.mxu0 0
    %1439 = vmatpush2.bf16.msra.mxu0 0
    %1440 = vmatprep.subr.bf16.mxu0 0
    %1441 = vmatpush2.bf16.msra.mxu0 0
    %1442 = vmatprep.subr.bf16.mxu0 0
    %1443 = vmatpush2.bf16.msra.mxu0 0
    %1444 = vmatprep.subr.bf16.mxu0 0
    %1445 = vmatpush2.bf16.msra.mxu0 0
    %1446 = vmatprep.subr.bf16.mxu0 0
    %1447 = vmatpush2.bf16.msra.mxu0 0
    %1448 = vmatprep.mubr.bf16.mxu0 0
    %1449 = vmatmul.mubr.bf16.gmra.mxu0 %v1344
    %v1450 = vpop.f32.mrf.mxu0
    %v1451 = vadd.f32 %v1366, %v1450
    %v1452 = vpop.f32.mrf.mxu0
    %v1453 = vpop.f32.mrf.mxu0
    %v1454 = vadd.f32 %v1366, %v1453
    %v1455 = vpop.f32.mrf.mxu0
    %1456 = vdwg.mxu0
    %v1457 = vpack.c.bf16 %v1341, %v1338
    %v1458 = vpack.c.bf16 %v1342, %v1339
    %v1459 = vld [vmem:[#allocation4] sm:$0xff]
    %v1460 = vld [vmem:[#allocation4 + $0x8] sm:$0xff]
    %v1461 = vld [vmem:[#allocation4 + $0x10] sm:$0xff]
    %v1462 = vld [vmem:[#allocation4 + $0x18] sm:$0xff]
    %v1463 = vld [vmem:[#allocation4 + $0x20] sm:$0xff]
    %v1464 = vld [vmem:[#allocation4 + $0x28] sm:$0xff]
    %v1465 = vld [vmem:[#allocation4 + $0x30] sm:$0xff]
    %v1466 = vld [vmem:[#allocation4 + $0x38] sm:$0xff]
    %v1467 = vld [vmem:[#allocation4 + $0x40] sm:$0xff]
    %v1468 = vld [vmem:[#allocation4 + $0x48] sm:$0xff]
    %v1469 = vld [vmem:[#allocation4 + $0x50] sm:$0xff]
    %v1470 = vld [vmem:[#allocation4 + $0x58] sm:$0xff]
    %v1471 = vld [vmem:[#allocation4 + $0x60] sm:$0xff]
    %v1472 = vld [vmem:[#allocation4 + $0x68] sm:$0xff]
    %v1473 = vld [vmem:[#allocation4 + $0x70] sm:$0xff]
    %v1474 = vld [vmem:[#allocation4 + $0x78] sm:$0xff]
    %v1475 = vld [vmem:[#allocation4 + $0x80] sm:$0xff]
    %v1476 = vld [vmem:[#allocation4 + $0x88] sm:$0xff]
    %v1477 = vld [vmem:[#allocation4 + $0x90] sm:$0xff]
    %v1478 = vld [vmem:[#allocation4 + $0x98] sm:$0xff]
    %v1479 = vld [vmem:[#allocation4 + $0xa0] sm:$0xff]
    %v1480 = vld [vmem:[#allocation4 + $0xa8] sm:$0xff]
    %v1481 = vld [vmem:[#allocation4 + $0xb0] sm:$0xff]
    %v1482 = vld [vmem:[#allocation4 + $0xb8] sm:$0xff]
    %v1483 = vld [vmem:[#allocation4 + $0xc0] sm:$0xff]
    %v1484 = vld [vmem:[#allocation4 + $0xc8] sm:$0xff]
    %v1485 = vld [vmem:[#allocation4 + $0xd0] sm:$0xff]
    %v1486 = vld [vmem:[#allocation4 + $0xd8] sm:$0xff]
    %v1487 = vld [vmem:[#allocation4 + $0xe0] sm:$0xff]
    %v1488 = vld [vmem:[#allocation4 + $0xe8] sm:$0xff]
    %v1489 = vld [vmem:[#allocation4 + $0xf0] sm:$0xff]
    %v1490 = vld [vmem:[#allocation4 + $0xf8] sm:$0xff]
    %v1491 = vpack.c.bf16 %v1454, %v1451
    %v1492 = vld [vmem:[#allocation6] sm:$0xff]
    %v1493 = vld [vmem:[#allocation6 + $0x8] sm:$0xff]
    %v1494 = vld [vmem:[#allocation6 + $0x10] sm:$0xff]
    %v1495 = vld [vmem:[#allocation6 + $0x18] sm:$0xff]
    %v1496 = vld [vmem:[#allocation6 + $0x20] sm:$0xff]
    %v1497 = vld [vmem:[#allocation6 + $0x28] sm:$0xff]
    %v1498 = vld [vmem:[#allocation6 + $0x30] sm:$0xff]
    %v1499 = vld [vmem:[#allocation6 + $0x38] sm:$0xff]
    %v1500 = vld [vmem:[#allocation6 + $0x40] sm:$0xff]
    %v1501 = vld [vmem:[#allocation6 + $0x48] sm:$0xff]
    %v1502 = vld [vmem:[#allocation6 + $0x50] sm:$0xff]
    %v1503 = vld [vmem:[#allocation6 + $0x58] sm:$0xff]
    %v1504 = vld [vmem:[#allocation6 + $0x60] sm:$0xff]
    %v1505 = vld [vmem:[#allocation6 + $0x68] sm:$0xff]
    %v1506 = vld [vmem:[#allocation6 + $0x70] sm:$0xff]
    %v1507 = vld [vmem:[#allocation6 + $0x78] sm:$0xff]
    %v1524 = vunpack.c.l.b16 %v1492
    %v1525 = vunpack.c.h.b16 %v1492
    %v1526 = vunpack.c.l.b16 %v1493
    %v1527 = vunpack.c.h.b16 %v1493
    %v1528 = vunpack.c.l.b16 %v1494
    %v1529 = vunpack.c.h.b16 %v1494
    %v1530 = vunpack.c.l.b16 %v1495
    %v1531 = vunpack.c.h.b16 %v1495
    %v1532 = vunpack.c.l.b16 %v1496
    %v1533 = vunpack.c.h.b16 %v1496
    %v1534 = vunpack.c.l.b16 %v1497
    %v1535 = vunpack.c.h.b16 %v1497
    %v1536 = vunpack.c.l.b16 %v1498
    %v1537 = vunpack.c.h.b16 %v1498
    %v1538 = vunpack.c.l.b16 %v1499
    %v1539 = vunpack.c.h.b16 %v1499
    %v1540 = vunpack.c.l.b16 %v1500
    %v1541 = vunpack.c.h.b16 %v1500
    %v1542 = vunpack.c.l.b16 %v1501
    %v1543 = vunpack.c.h.b16 %v1501
    %v1544 = vunpack.c.l.b16 %v1502
    %v1545 = vunpack.c.h.b16 %v1502
    %v1546 = vunpack.c.l.b16 %v1503
    %v1547 = vunpack.c.h.b16 %v1503
    %v1548 = vunpack.c.l.b16 %v1504
    %v1549 = vunpack.c.h.b16 %v1504
    %v1550 = vunpack.c.l.b16 %v1505
    %v1551 = vunpack.c.h.b16 %v1505
    %v1552 = vunpack.c.l.b16 %v1506
    %v1553 = vunpack.c.h.b16 %v1506
    %v1554 = vunpack.c.l.b16 %v1507
    %v1555 = vunpack.c.h.b16 %v1507
    %v1556 = vpack.c.b16 %v1526, %v1524
    %v1557 = vpack.c.b16 %v1527, %v1525
    %v1558 = vpack.c.b16 %v1530, %v1528
    %v1559 = vpack.c.b16 %v1531, %v1529
    %v1560 = vpack.c.b16 %v1534, %v1532
    %v1561 = vpack.c.b16 %v1535, %v1533
    %v1562 = vpack.c.b16 %v1538, %v1536
    %v1563 = vpack.c.b16 %v1539, %v1537
    %v1564 = vpack.c.b16 %v1542, %v1540
    %v1565 = vpack.c.b16 %v1543, %v1541
    %v1566 = vpack.c.b16 %v1546, %v1544
    %v1567 = vpack.c.b16 %v1547, %v1545
    %v1568 = vpack.c.b16 %v1550, %v1548
    %v1569 = vpack.c.b16 %v1551, %v1549
    %v1570 = vpack.c.b16 %v1554, %v1552
    %v1571 = vpack.c.b16 %v1555, %v1553
    %1588 = vmatprep.subr.bf16.mxu0 %v1571
    %1589 = vmatpush1.bf16.msra.mxu0 %v1570
    %1590 = vmatprep.subr.bf16.mxu0 %v1569
    %1591 = vmatpush1.bf16.msra.mxu0 %v1568
    %1592 = vmatprep.subr.bf16.mxu0 %v1567
    %1593 = vmatpush1.bf16.msra.mxu0 %v1566
    %1594 = vmatprep.subr.bf16.mxu0 %v1565
    %1595 = vmatpush1.bf16.msra.mxu0 %v1564
    %1596 = vmatprep.subr.bf16.mxu0 %v1563
    %1597 = vmatpush1.bf16.msra.mxu0 %v1562
    %1598 = vmatprep.subr.bf16.mxu0 %v1561
    %1599 = vmatpush1.bf16.msra.mxu0 %v1560
    %1600 = vmatprep.subr.bf16.mxu0 %v1559
    %1601 = vmatpush1.bf16.msra.mxu0 %v1558
    %1602 = vmatprep.subr.bf16.mxu0 %v1557
    %1603 = vmatpush1.bf16.msra.mxu0 %v1556
    %1604 = vmatprep.subr.bf16.mxu0 0
    %1605 = vmatpush2.bf16.msra.mxu0 0
    %1606 = vmatprep.subr.bf16.mxu0 0
    %1607 = vmatpush2.bf16.msra.mxu0 0
    %1608 = vmatprep.subr.bf16.mxu0 0
    %1609 = vmatpush2.bf16.msra.mxu0 0
    %1610 = vmatprep.subr.bf16.mxu0 0
    %1611 = vmatpush2.bf16.msra.mxu0 0
    %1612 = vmatprep.subr.bf16.mxu0 0
    %1613 = vmatpush2.bf16.msra.mxu0 0
    %1614 = vmatprep.subr.bf16.mxu0 0
    %1615 = vmatpush2.bf16.msra.mxu0 0
    %1616 = vmatprep.subr.bf16.mxu0 0
    %1617 = vmatpush2.bf16.msra.mxu0 0
    %1618 = vmatprep.subr.bf16.mxu0 0
    %1619 = vmatpush2.bf16.msra.mxu0 0
    %1620 = vmatprep.mubr.bf16.mxu0 0
    %1621 = vmatmul.mubr.bf16.gmra.mxu0 %v1491
    %v1622 = vpop.f32.mrf.mxu0
    %v1623 = vadd.f32 0.0, %v1622
    %v1624 = vpop.f32.mrf.mxu0
    %v1625 = vadd.f32 0.0, %v1624
    %v1626 = vpop.f32.mrf.mxu0
    %v1627 = vadd.f32 0.0, %v1626
    %v1628 = vpop.f32.mrf.mxu0
    %v1629 = vadd.f32 0.0, %v1628
    %1630 = vdwg.mxu0
    %v1663 = vunpack.c.l.b16 %v1459
    %v1664 = vunpack.c.h.b16 %v1459
    %v1665 = vunpack.c.l.b16 %v1460
    %v1666 = vunpack.c.h.b16 %v1460
    %v1667 = vunpack.c.l.b16 %v1461
    %v1668 = vunpack.c.h.b16 %v1461
    %v1669 = vunpack.c.l.b16 %v1462
    %v1670 = vunpack.c.h.b16 %v1462
    %v1671 = vunpack.c.l.b16 %v1463
    %v1672 = vunpack.c.h.b16 %v1463
    %v1673 = vunpack.c.l.b16 %v1464
    %v1674 = vunpack.c.h.b16 %v1464
    %v1675 = vunpack.c.l.b16 %v1465
    %v1676 = vunpack.c.h.b16 %v1465
    %v1677 = vunpack.c.l.b16 %v1466
    %v1678 = vunpack.c.h.b16 %v1466
    %v1679 = vunpack.c.l.b16 %v1467
    %v1680 = vunpack.c.h.b16 %v1467
    %v1681 = vunpack.c.l.b16 %v1468
    %v1682 = vunpack.c.h.b16 %v1468
    %v1683 = vunpack.c.l.b16 %v1469
    %v1684 = vunpack.c.h.b16 %v1469
    %v1685 = vunpack.c.l.b16 %v1470
    %v1686 = vunpack.c.h.b16 %v1470
    %v1687 = vunpack.c.l.b16 %v1471
    %v1688 = vunpack.c.h.b16 %v1471
    %v1689 = vunpack.c.l.b16 %v1472
    %v1690 = vunpack.c.h.b16 %v1472
    %v1691 = vunpack.c.l.b16 %v1473
    %v1692 = vunpack.c.h.b16 %v1473
    %v1693 = vunpack.c.l.b16 %v1474
    %v1694 = vunpack.c.h.b16 %v1474
    %v1695 = vunpack.c.l.b16 %v1475
    %v1696 = vunpack.c.h.b16 %v1475
    %v1697 = vunpack.c.l.b16 %v1476
    %v1698 = vunpack.c.h.b16 %v1476
    %v1699 = vunpack.c.l.b16 %v1477
    %v1700 = vunpack.c.h.b16 %v1477
    %v1701 = vunpack.c.l.b16 %v1478
    %v1702 = vunpack.c.h.b16 %v1478
    %v1703 = vunpack.c.l.b16 %v1479
    %v1704 = vunpack.c.h.b16 %v1479
    %v1705 = vunpack.c.l.b16 %v1480
    %v1706 = vunpack.c.h.b16 %v1480
    %v1707 = vunpack.c.l.b16 %v1481
    %v1708 = vunpack.c.h.b16 %v1481
    %v1709 = vunpack.c.l.b16 %v1482
    %v1710 = vunpack.c.h.b16 %v1482
    %v1711 = vunpack.c.l.b16 %v1483
    %v1712 = vunpack.c.h.b16 %v1483
    %v1713 = vunpack.c.l.b16 %v1484
    %v1714 = vunpack.c.h.b16 %v1484
    %v1715 = vunpack.c.l.b16 %v1485
    %v1716 = vunpack.c.h.b16 %v1485
    %v1717 = vunpack.c.l.b16 %v1486
    %v1718 = vunpack.c.h.b16 %v1486
    %v1719 = vunpack.c.l.b16 %v1487
    %v1720 = vunpack.c.h.b16 %v1487
    %v1721 = vunpack.c.l.b16 %v1488
    %v1722 = vunpack.c.h.b16 %v1488
    %v1723 = vunpack.c.l.b16 %v1489
    %v1724 = vunpack.c.h.b16 %v1489
    %v1725 = vunpack.c.l.b16 %v1490
    %v1726 = vunpack.c.h.b16 %v1490
    %v1727 = vpack.c.b16 %v1665, %v1663
    %v1728 = vpack.c.b16 %v1666, %v1664
    %v1729 = vpack.c.b16 %v1669, %v1667
    %v1730 = vpack.c.b16 %v1670, %v1668
    %v1731 = vpack.c.b16 %v1673, %v1671
    %v1732 = vpack.c.b16 %v1674, %v1672
    %v1733 = vpack.c.b16 %v1677, %v1675
    %v1734 = vpack.c.b16 %v1678, %v1676
    %v1735 = vpack.c.b16 %v1681, %v1679
    %v1736 = vpack.c.b16 %v1682, %v1680
    %v1737 = vpack.c.b16 %v1685, %v1683
    %v1738 = vpack.c.b16 %v1686, %v1684
    %v1739 = vpack.c.b16 %v1689, %v1687
    %v1740 = vpack.c.b16 %v1690, %v1688
    %v1741 = vpack.c.b16 %v1693, %v1691
    %v1742 = vpack.c.b16 %v1694, %v1692
    %v1743 = vpack.c.b16 %v1697, %v1695
    %v1744 = vpack.c.b16 %v1698, %v1696
    %v1745 = vpack.c.b16 %v1701, %v1699
    %v1746 = vpack.c.b16 %v1702, %v1700
    %v1747 = vpack.c.b16 %v1705, %v1703
    %v1748 = vpack.c.b16 %v1706, %v1704
    %v1749 = vpack.c.b16 %v1709, %v1707
    %v1750 = vpack.c.b16 %v1710, %v1708
    %v1751 = vpack.c.b16 %v1713, %v1711
    %v1752 = vpack.c.b16 %v1714, %v1712
    %v1753 = vpack.c.b16 %v1717, %v1715
    %v1754 = vpack.c.b16 %v1718, %v1716
    %v1755 = vpack.c.b16 %v1721, %v1719
    %v1756 = vpack.c.b16 %v1722, %v1720
    %v1757 = vpack.c.b16 %v1725, %v1723
    %v1758 = vpack.c.b16 %v1726, %v1724
    %1791 = vmatprep.subr.bf16.mxu0 %v1742
    %1792 = vmatpush1.bf16.msra.mxu0 %v1741
    %1793 = vmatprep.subr.bf16.mxu0 %v1740
    %1794 = vmatpush1.bf16.msra.mxu0 %v1739
    %1795 = vmatprep.subr.bf16.mxu0 %v1738
    %1796 = vmatpush1.bf16.msra.mxu0 %v1737
    %1797 = vmatprep.subr.bf16.mxu0 %v1736
    %1798 = vmatpush1.bf16.msra.mxu0 %v1735
    %1799 = vmatprep.subr.bf16.mxu0 %v1734
    %1800 = vmatpush1.bf16.msra.mxu0 %v1733
    %1801 = vmatprep.subr.bf16.mxu0 %v1732
    %1802 = vmatpush1.bf16.msra.mxu0 %v1731
    %1803 = vmatprep.subr.bf16.mxu0 %v1730
    %1804 = vmatpush1.bf16.msra.mxu0 %v1729
    %1805 = vmatprep.subr.bf16.mxu0 %v1728
    %1806 = vmatpush1.bf16.msra.mxu0 %v1727
    %1807 = vmatprep.subr.bf16.mxu0 %v1758
    %1808 = vmatpush2.bf16.msra.mxu0 %v1757
    %1809 = vmatprep.subr.bf16.mxu0 %v1756
    %1810 = vmatpush2.bf16.msra.mxu0 %v1755
    %1811 = vmatprep.subr.bf16.mxu0 %v1754
    %1812 = vmatpush2.bf16.msra.mxu0 %v1753
    %1813 = vmatprep.subr.bf16.mxu0 %v1752
    %1814 = vmatpush2.bf16.msra.mxu0 %v1751
    %1815 = vmatprep.subr.bf16.mxu0 %v1750
    %1816 = vmatpush2.bf16.msra.mxu0 %v1749
    %1817 = vmatprep.subr.bf16.mxu0 %v1748
    %1818 = vmatpush2.bf16.msra.mxu0 %v1747
    %1819 = vmatprep.subr.bf16.mxu0 %v1746
    %1820 = vmatpush2.bf16.msra.mxu0 %v1745
    %1821 = vmatprep.subr.bf16.mxu0 %v1744
    %1822 = vmatpush2.bf16.msra.mxu0 %v1743
    %1823 = vmatprep.mubr.bf16.mxu0 %v1458
    %1824 = vmatmul.mubr.bf16.gmra.mxu0 %v1457
    %v1825 = vpop.f32.mrf.mxu0
    %v1826 = vadd.f32 %v1623, %v1825
    %v1827 = vpop.f32.mrf.mxu0
    %v1828 = vadd.f32 %v1625, %v1827
    %v1829 = vpop.f32.mrf.mxu0
    %v1830 = vadd.f32 %v1627, %v1829
    %v1831 = vpop.f32.mrf.mxu0
    %v1832 = vadd.f32 %v1629, %v1831
    %1833 = vdwg.mxu0
    %v1834 = vld [vmem:[%s7] sm:$0x3]
    %v1836 = vlaneseq
    %v1837 = vshrl.u32 %v1836, 7
    %v1838 = vsub.s32 0, %v1837
    %v1839 = vrot.slane %v1834, %v1838
    %v1840 = vlaneseq
    %v1841 = vshrl.u32 %v1840, 7
    %v1842 = vsub.s32 1, %v1841
    %v1843 = vrot.slane %v1834, %v1842
    %v1846 = vadd.f32 %v1826, %v1839
    %v1847 = vadd.f32 %v1828, %v1843
    %v1848 = vadd.f32 %v1830, %v1839
    %v1849 = vadd.f32 %v1832, %v1843
    %v1850 = vpack.c.bf16 %v1848, %v1846
    %v1851 = vpack.c.bf16 %v1849, %v1847
    %v1854 = vunpack.c.l.b16 %v1850
    %v1855 = vunpack.c.l.b16 %v1851
    %v1856 = vunpack.c.h.b16 %v1850
    %v1857 = vunpack.c.h.b16 %v1851
    %v1858 = vpack.c.b16 %v1855, %v1854
    %v1859 = vpack.c.b16 %v1857, %v1856
    %1862 = vst [vmem:[%s8] sm:$0xff] %v1858
    %1863 = vst [vmem:[%s8 + $0x8] sm:$0xff] %v1859
    %v1865 = vunpack.c.l.b16 %v1491
    %v1866 = vunpack.c.h.b16 %v1491
    %v1867 = vpack.c.b16 %v1865, %v1865
    %v1868 = vpack.c.b16 %v1866, %v1866
    %vm1871 = vcmask 257024
    %1872 = vst.msk [vmem:[%s9] sm:$0xf] %vm1871, %v1867
    %1873 = vst.msk [vmem:[%s9 + $0x4] sm:$0xf] %vm1871, %v1868
    // Predicated region
    $region46: #{enhanced_memory_layer.1} parent=1 // pred_check
      _
    $region47: #{enhanced_memory_layer.1} parent=1 // pred_check_branch
      %1875 = sbr.rel (0) target = $region49
    $region48: #{enhanced_memory_layer.1} parent=1 // pred_region
      _
    $region49: #{enhanced_memory_layer.1} parent=1 // pred_fallthru
      _
    // Predicated region
    $region50: #{enhanced_memory_layer.1} parent=1 // pred_check
      _
    $region51: #{enhanced_memory_layer.1} parent=1 // pred_check_branch
      %1877 = sbr.rel (0) target = $region53
    $region52: #{enhanced_memory_layer.1} parent=1 // pred_region
      _
    $region53: #{enhanced_memory_layer.1} parent=1 // pred_fallthru
      _
    // Predicated region
    $region54: #{enhanced_memory_layer.1} parent=1 // pred_check
      _
    $region55: #{enhanced_memory_layer.1} parent=1 // pred_check_branch
      %1879 = sbr.rel (0) target = $region57
    $region56: #{enhanced_memory_layer.1} parent=1 // pred_region
      _
    $region57: #{enhanced_memory_layer.1} parent=1 // pred_fallthru
      _
    // Predicated region
    $region58: #{enhanced_memory_layer.1} parent=1 // pred_check
      _
    $region59: #{enhanced_memory_layer.1} parent=1 // pred_check_branch
      %1881 = sbr.rel (0) target = $region61
    $region60: #{enhanced_memory_layer.1} parent=1 // pred_region
      _
    $region61: #{enhanced_memory_layer.1} parent=1 // pred_fallthru
      _
    %1882 = vsyncpa [#allocation3], 1
    %1883 = vsyncpa [#allocation5], 1

</llo_original>
